<compile_context>
chip_gen: v7x
topology: tpu7x:2x2x1
jax: 0.10.0
libtpu: 0.0.40
codegen_flags: <defaults>
</compile_context>

<pallas_src>
import numpy as np
import jax
import jax.numpy as jnp
from jax.experimental import pallas as pl
from jax.experimental.pallas import tpu as pltpu


# ---------------------------------------------------------------------------
# Kernel A: conv1 + ReLU + AvgPool(2,2) + conv2 (2x2) + ReLU, channel-major.
# One grid step per batch element; all intermediates stay in VMEM/vregs.
# ---------------------------------------------------------------------------
def _conv_stack_kernel(cols_ref, w1_ref, b1_ref, ps_ref, w2_ref, b2_ref, o_ref):
    # cols_ref: (1, Kpad, P1)   im2col(x) per batch, feature order (c, kh, kw)
    # w1_ref:   (C2, Kpad)      conv1 weight, K zero-padded to Kpad
    # b1_ref:   (C2, 1)
    # ps_ref:   (4, P1, P2)     fused avg-pool + 2x2 patch-selection matrices
    # w2_ref:   (4, C4, C2)     conv2 weight, one (C4, C2) slab per 2x2 offset
    # b2_ref:   (C4, 1)
    # o_ref:    (C4, P2)        conv2 output, channel-major => NCHW flat order
    cols = cols_ref[0]                                                # (Kpad, P1)
    y1 = jnp.dot(w1_ref[...], cols, preferred_element_type=jnp.float32)
    y1 = jnp.maximum(y1 + b1_ref[...], 0.0)                           # (C2, P1)

    acc = None
    for k in range(4):                                                # 2x2 offsets
        # pooled-and-gathered patch rows for this kernel offset: (C2, P2)
        patch = jnp.dot(y1, ps_ref[k], preferred_element_type=jnp.float32)
        term = jnp.dot(w2_ref[k], patch, preferred_element_type=jnp.float32)
        acc = term if acc is None else acc + term                     # (C4, P2)

    o_ref[...] = jnp.maximum(acc + b2_ref[...], 0.0)


# ---------------------------------------------------------------------------
# Kernel B: fc1 + ReLU + fc2 + ReLU + fc3, fully fused (weights < 10 KiB).
# ---------------------------------------------------------------------------
def _fc_stack_kernel(x_ref, w1_ref, b1_ref, w2_ref, b2_ref, w3_ref, b3_ref,
                     o_ref):
    h = jnp.dot(x_ref[...], w1_ref[...], preferred_element_type=jnp.float32)
    h = jnp.maximum(h + b1_ref[...], 0.0)
    h = jnp.dot(h, w2_ref[...], preferred_element_type=jnp.float32)
    h = jnp.maximum(h + b2_ref[...], 0.0)
    o_ref[...] = (jnp.dot(h, w3_ref[...], preferred_element_type=jnp.float32)
                  + b3_ref[...])


# ---------------------------------------------------------------------------
# Host-side setup helpers (tiny, XLA-fused; run once per forward)
# ---------------------------------------------------------------------------
def _round_up(v, m):
    return (v + m - 1) // m * m


def _im2col_cm(x, kh, kw, pad, kpad):
    """x: (N, C, H, W) -> (N, Kpad, OH*OW); feature order (c, kh, kw)."""
    n, c, h, w = x.shape
    xp = jnp.pad(x, ((0, 0), (0, 0), (pad, pad), (pad, pad)))
    oh, ow = h + 2 * pad - kh + 1, w + 2 * pad - kw + 1
    slabs = [xp[:, :, i:i + oh, j:j + ow] for i in range(kh) for j in range(kw)]
    cols = jnp.stack(slabs, axis=2)                     # (N, C, kh*kw, OH, OW)
    cols = cols.reshape(n, c * kh * kw, oh * ow)        # feature = c*kh*kw + k
    cols = jnp.pad(cols, ((0, 0), (0, kpad - c * kh * kw), (0, 0)))
    return cols, oh, ow


def _pool_select_matrices(oh1, ow1):
    """(4, OH1*OW1, OH2*OW2): AvgPool2d(2,2) fused with conv2's 2x2 im2col."""
    ph, pw = oh1 // 2, ow1 // 2
    oh2, ow2 = ph - 1, pw - 1
    ps = np.zeros((4, oh1 * ow1, oh2 * ow2), np.float32)
    for di in range(2):
        for dj in range(2):
            kk = di * 2 + dj
            for i in range(oh2):
                for j in range(ow2):
                    q = i * ow2 + j
                    for a in range(2):
                        for b in range(2):
                            s = (2 * (i + di) + a) * ow1 + (2 * (j + dj) + b)
                            ps[kk, s, q] = 0.25
    return ps, oh2, ow2


# ---------------------------------------------------------------------------
# CNN forward (mirrors the PyTorch module exactly)
# ---------------------------------------------------------------------------
def cnn_forward(x, params):
    (w1, b1, w2, b2, fw1, fb1, fw2, fb2, fw3, fb3) = params
    n, c, h, w = x.shape
    c2, c4 = w1.shape[0], w2.shape[0]          # 2*C and 4*C

    # ---- conv-stack setup ----------------------------------------------
    k1 = c * 5 * 5
    kpad = _round_up(k1, 128)                  # K-aligned contraction dim
    cols, oh1, ow1 = _im2col_cm(x, 5, 5, 1, kpad)      # (N, Kpad, P1)
    p1 = oh1 * ow1
    ps_np, oh2, ow2 = _pool_select_matrices(oh1, ow1)  # (4, P1, P2)
    p2 = oh2 * ow2
    ps = jnp.asarray(ps_np)

    w1m = jnp.pad(w1.reshape(c2, k1), ((0, 0), (0, kpad - k1)))   # (C2, Kpad)
    b1c = b1.reshape(c2, 1)
    w2b = w2.transpose(2, 3, 0, 1).reshape(4, c4, c2)             # (4, C4, C2)
    b2c = b2.reshape(c4, 1)

    conv_flops = n * 2 * (c2 * kpad * p1 + 4 * c2 * p1 * p2 + 4 * c4 * c2 * p2)
    conv_bytes = 4 * (n * kpad * p1 + c2 * kpad + c2 + 4 * p1 * p2
                      + 4 * c4 * c2 + c4 + n * c4 * p2)

    conv_out = pl.pallas_call(
        _conv_stack_kernel,
        out_shape=jax.ShapeDtypeStruct((n * c4, p2), jnp.float32),
        grid_spec=pl.GridSpec(
            grid=(n,),
            in_specs=[
                pl.BlockSpec((1, kpad, p1), lambda i: (i, 0, 0)),
                pl.BlockSpec((c2, kpad), lambda i: (0, 0)),
                pl.BlockSpec((c2, 1), lambda i: (0, 0)),
                pl.BlockSpec((4, p1, p2), lambda i: (0, 0, 0)),
                pl.BlockSpec((4, c4, c2), lambda i: (0, 0, 0)),
                pl.BlockSpec((c4, 1), lambda i: (0, 0)),
            ],
            out_specs=pl.BlockSpec((c4, p2), lambda i: (i, 0)),
        ),
        compiler_params=pltpu.CompilerParams(
            dimension_semantics=("parallel",)),
        cost_estimate=pl.CostEstimate(
            flops=conv_flops, transcendentals=0, bytes_accessed=conv_bytes),
    )(cols, w1m, b1c, ps, w2b, b2c)

    # conv_out rows are (n, out_channel) and columns are (h, w), i.e. exactly
    # NCHW flat order, so PyTorch's `conv2_x.view(-1, 4C)` is one reshape.
    fc_in = conv_out.reshape(-1, c4)                               # (N*OH2*OW2, C4)
    m = fc_in.shape[0]

    fc_flops = 2 * m * (c4 * 120 + 120 * 30 + 30 * 1)
    fc_bytes = 4 * (m * c4 + c4 * 120 + 120 + 120 * 30 + 30 + 30 + 1 + m)

    out = pl.pallas_call(
        _fc_stack_kernel,
        out_shape=jax.ShapeDtypeStruct((m, 1), jnp.float32),
        cost_estimate=pl.CostEstimate(
            flops=fc_flops, transcendentals=0, bytes_accessed=fc_bytes),
    )(fc_in, fw1.T, fb1.reshape(1, -1), fw2.T, fb2.reshape(1, -1),
      fw3.T, fb3.reshape(1, -1))
    return out


# ---------------------------------------------------------------------------
# Deterministic parameter init (PyTorch-like uniform bounds)
# ---------------------------------------------------------------------------
def init_params(key, c):
    c2, c4 = 2 * c, 4 * c
    ks = jax.random.split(key, 10)

    def u(k, shape, fan_in):
        bound = 1.0 / np.sqrt(fan_in)
        return jax.random.uniform(k, shape, jnp.float32, -bound, bound)

    w1 = u(ks[0], (c2, c, 5, 5), c * 25)
    b1 = u(ks[1], (c2,), c * 25)
    w2 = u(ks[2], (c4, c2, 2, 2), c2 * 4)
    b2 = u(ks[3], (c4,), c2 * 4)
    fw1 = u(ks[4], (120, c4), c4)
    fb1 = u(ks[5], (120,), c4)
    fw2 = u(ks[6], (30, 120), 120)
    fb2 = u(ks[7], (30,), 120)
    fw3 = u(ks[8], (1, 30), 30)
    fb3 = u(ks[9], (1,), 30)
    return (w1, b1, w2, b2, fw1, fb1, fw2, fb2, fw3, fb3)


# ---------------------------------------------------------------------------
# Pure-JAX reference (ground truth, f32 HIGHEST precision)
# ---------------------------------------------------------------------------
def reference_forward(x, params):
    (w1, b1, w2, b2, fw1, fb1, fw2, fb2, fw3, fb3) = params
    hp = jax.lax.Precision.HIGHEST
    y = jax.lax.conv_general_dilated(
        x, w1, (1, 1), [(1, 1), (1, 1)],
        dimension_numbers=("NCHW", "OIHW", "NCHW"), precision=hp)
    y = jax.nn.relu(y + b1[None, :, None, None])
    y = jax.lax.reduce_window(y, 0.0, jax.lax.add,
                              (1, 1, 2, 2), (1, 1, 2, 2), "VALID") / 4.0
    y = jax.lax.conv_general_dilated(
        y, w2, (1, 1), [(0, 0), (0, 0)],
        dimension_numbers=("NCHW", "OIHW", "NCHW"), precision=hp)
    y = jax.nn.relu(y + b2[None, :, None, None])
    y = y.reshape(-1, w2.shape[0])
    y = jax.nn.relu(jnp.dot(y, fw1.T, precision=hp) + fb1)
    y = jax.nn.relu(jnp.dot(y, fw2.T, precision=hp) + fb2)
    return jnp.dot(y, fw3.T, precision=hp) + fb3


if __name__ == "__main__":
    key = jax.random.PRNGKey(0)
    kx, kp = jax.random.split(key)

    input_channels = 4
    x = jax.random.normal(kx, (2, input_channels, 16, 16), jnp.float32)
    params = init_params(kp, input_channels)

    out = jax.jit(cnn_forward)(x, params)
    out = jax.block_until_ready(out)

    ref = reference_forward(x, params)
    assert out.shape == ref.shape, (out.shape, ref.shape)
    # Kernel matmuls run at native MXU precision (default, not HIGHEST) per the
    # performance review; compare against the f32-HIGHEST reference with a
    # correspondingly relaxed (but still bug-catching) tolerance.
    np.testing.assert_allclose(np.asarray(out), np.asarray(ref),
                               rtol=2e-2, atol=2e-2)
    print("KERNEL_OK")
</pallas_src>

<mosaic_0001>
module attributes {stable_mosaic.version = 11 : i64} {
  func.func @_conv_stack_kernel(%arg0: i32, %arg1: memref<1x128x196xf32, #tpu.memory_space<vmem>>, %arg2: memref<8x128xf32, #tpu.memory_space<vmem>>, %arg3: memref<8x1xf32, #tpu.memory_space<vmem>>, %arg4: memref<4x196x36xf32, #tpu.memory_space<vmem>>, %arg5: memref<4x16x8xf32, #tpu.memory_space<vmem>>, %arg6: memref<16x1xf32, #tpu.memory_space<vmem>>, %arg7: memref<16x36xf32, #tpu.memory_space<vmem>>) attributes {dimension_semantics = [#tpu.dimension_semantics<parallel>], iteration_bounds = array<i64: 2>, scalar_prefetch = 0 : i64, scratch_operands = 0 : i64, tpu.core_type = #tpu.core_type<tc>, window_params = [{transform_indices = @transform_0, window_bounds = array<i64: 1, 128, 196>}, {pipeline_mode = #tpu.pipeline_mode<synchronous>, transform_indices = @transform_1, window_bounds = array<i64: 8, 128>}, {pipeline_mode = #tpu.pipeline_mode<synchronous>, transform_indices = @transform_2, window_bounds = array<i64: 8, 1>}, {pipeline_mode = #tpu.pipeline_mode<synchronous>, transform_indices = @transform_3, window_bounds = array<i64: 4, 196, 36>}, {pipeline_mode = #tpu.pipeline_mode<synchronous>, transform_indices = @transform_4, window_bounds = array<i64: 4, 16, 8>}, {pipeline_mode = #tpu.pipeline_mode<synchronous>, transform_indices = @transform_5, window_bounds = array<i64: 16, 1>}, {transform_indices = @transform_6, window_bounds = array<i64: 16, 36>}]} {
    %c0 = arith.constant 0 : index
    %c0_0 = arith.constant 0 : index
    %c0_1 = arith.constant 0 : index
    %0 = vector.load %arg1[%c0, %c0_0, %c0_1] : memref<1x128x196xf32, #tpu.memory_space<vmem>>, vector<1x128x196xf32>
    %1 = vector.shape_cast %0 : vector<1x128x196xf32> to vector<128x196xf32>
    %c0_2 = arith.constant 0 : index
    %c0_3 = arith.constant 0 : index
    %2 = vector.load %arg2[%c0_2, %c0_3] : memref<8x128xf32, #tpu.memory_space<vmem>>, vector<8x128xf32>
    %cst = arith.constant dense<0.000000e+00> : vector<8x196xf32>
    %3 = tpu.matmul %2, %1, %cst {dimension_numbers = #tpu.dot_dimension_numbers<[1], [0], [0], [1], [0, 0, 1, 1], [], []>} : vector<8x128xf32>, vector<128x196xf32>, vector<8x196xf32> -> vector<8x196xf32>
    %c0_4 = arith.constant 0 : index
    %c0_5 = arith.constant 0 : index
    %4 = vector.load %arg3[%c0_4, %c0_5] : memref<8x1xf32, #tpu.memory_space<vmem>>, vector<8x1xf32>
    %5 = vector.broadcast %4 : vector<8x1xf32> to vector<8x196xf32>
    %6 = arith.addf %3, %5 : vector<8x196xf32>
    %cst_6 = arith.constant 0.000000e+00 : f32
    %7 = vector.broadcast %cst_6 : f32 to vector<8x196xf32>
    %8 = arith.maximumf %6, %7 : vector<8x196xf32>
    %c0_7 = arith.constant 0 : index
    %c0_8 = arith.constant 0 : index
    %c0_9 = arith.constant 0 : index
    %9 = vector.load %arg4[%c0_7, %c0_8, %c0_9] : memref<4x196x36xf32, #tpu.memory_space<vmem>>, vector<1x196x36xf32>
    %10 = vector.shape_cast %9 : vector<1x196x36xf32> to vector<196x36xf32>
    %cst_10 = arith.constant dense<0.000000e+00> : vector<8x36xf32>
    %11 = tpu.matmul %8, %10, %cst_10 {dimension_numbers = #tpu.dot_dimension_numbers<[1], [0], [0], [1], [0, 0, 1, 1], [], []>} : vector<8x196xf32>, vector<196x36xf32>, vector<8x36xf32> -> vector<8x36xf32>
    %c0_11 = arith.constant 0 : index
    %c0_12 = arith.constant 0 : index
    %c0_13 = arith.constant 0 : index
    %12 = vector.load %arg5[%c0_11, %c0_12, %c0_13] : memref<4x16x8xf32, #tpu.memory_space<vmem>>, vector<1x16x8xf32>
    %13 = vector.shape_cast %12 : vector<1x16x8xf32> to vector<16x8xf32>
    %cst_14 = arith.constant dense<0.000000e+00> : vector<16x36xf32>
    %14 = tpu.matmul %13, %11, %cst_14 {dimension_numbers = #tpu.dot_dimension_numbers<[1], [0], [0], [1], [0, 0, 1, 1], [], []>} : vector<16x8xf32>, vector<8x36xf32>, vector<16x36xf32> -> vector<16x36xf32>
    %c1 = arith.constant 1 : index
    %c0_15 = arith.constant 0 : index
    %c0_16 = arith.constant 0 : index
    %15 = vector.load %arg4[%c1, %c0_15, %c0_16] : memref<4x196x36xf32, #tpu.memory_space<vmem>>, vector<1x196x36xf32>
    %16 = vector.shape_cast %15 : vector<1x196x36xf32> to vector<196x36xf32>
    %cst_17 = arith.constant dense<0.000000e+00> : vector<8x36xf32>
    %17 = tpu.matmul %8, %16, %cst_17 {dimension_numbers = #tpu.dot_dimension_numbers<[1], [0], [0], [1], [0, 0, 1, 1], [], []>} : vector<8x196xf32>, vector<196x36xf32>, vector<8x36xf32> -> vector<8x36xf32>
    %c1_18 = arith.constant 1 : index
    %c0_19 = arith.constant 0 : index
    %c0_20 = arith.constant 0 : index
    %18 = vector.load %arg5[%c1_18, %c0_19, %c0_20] : memref<4x16x8xf32, #tpu.memory_space<vmem>>, vector<1x16x8xf32>
    %19 = vector.shape_cast %18 : vector<1x16x8xf32> to vector<16x8xf32>
    %cst_21 = arith.constant dense<0.000000e+00> : vector<16x36xf32>
    %20 = tpu.matmul %19, %17, %cst_21 {dimension_numbers = #tpu.dot_dimension_numbers<[1], [0], [0], [1], [0, 0, 1, 1], [], []>} : vector<16x8xf32>, vector<8x36xf32>, vector<16x36xf32> -> vector<16x36xf32>
    %21 = arith.addf %14, %20 : vector<16x36xf32>
    %c2 = arith.constant 2 : index
    %c0_22 = arith.constant 0 : index
    %c0_23 = arith.constant 0 : index
    %22 = vector.load %arg4[%c2, %c0_22, %c0_23] : memref<4x196x36xf32, #tpu.memory_space<vmem>>, vector<1x196x36xf32>
    %23 = vector.shape_cast %22 : vector<1x196x36xf32> to vector<196x36xf32>
    %cst_24 = arith.constant dense<0.000000e+00> : vector<8x36xf32>
    %24 = tpu.matmul %8, %23, %cst_24 {dimension_numbers = #tpu.dot_dimension_numbers<[1], [0], [0], [1], [0, 0, 1, 1], [], []>} : vector<8x196xf32>, vector<196x36xf32>, vector<8x36xf32> -> vector<8x36xf32>
    %c2_25 = arith.constant 2 : index
    %c0_26 = arith.constant 0 : index
    %c0_27 = arith.constant 0 : index
    %25 = vector.load %arg5[%c2_25, %c0_26, %c0_27] : memref<4x16x8xf32, #tpu.memory_space<vmem>>, vector<1x16x8xf32>
    %26 = vector.shape_cast %25 : vector<1x16x8xf32> to vector<16x8xf32>
    %cst_28 = arith.constant dense<0.000000e+00> : vector<16x36xf32>
    %27 = tpu.matmul %26, %24, %cst_28 {dimension_numbers = #tpu.dot_dimension_numbers<[1], [0], [0], [1], [0, 0, 1, 1], [], []>} : vector<16x8xf32>, vector<8x36xf32>, vector<16x36xf32> -> vector<16x36xf32>
    %28 = arith.addf %21, %27 : vector<16x36xf32>
    %c3 = arith.constant 3 : index
    %c0_29 = arith.constant 0 : index
    %c0_30 = arith.constant 0 : index
    %29 = vector.load %arg4[%c3, %c0_29, %c0_30] : memref<4x196x36xf32, #tpu.memory_space<vmem>>, vector<1x196x36xf32>
    %30 = vector.shape_cast %29 : vector<1x196x36xf32> to vector<196x36xf32>
    %cst_31 = arith.constant dense<0.000000e+00> : vector<8x36xf32>
    %31 = tpu.matmul %8, %30, %cst_31 {dimension_numbers = #tpu.dot_dimension_numbers<[1], [0], [0], [1], [0, 0, 1, 1], [], []>} : vector<8x196xf32>, vector<196x36xf32>, vector<8x36xf32> -> vector<8x36xf32>
    %c3_32 = arith.constant 3 : index
    %c0_33 = arith.constant 0 : index
    %c0_34 = arith.constant 0 : index
    %32 = vector.load %arg5[%c3_32, %c0_33, %c0_34] : memref<4x16x8xf32, #tpu.memory_space<vmem>>, vector<1x16x8xf32>
    %33 = vector.shape_cast %32 : vector<1x16x8xf32> to vector<16x8xf32>
    %cst_35 = arith.constant dense<0.000000e+00> : vector<16x36xf32>
    %34 = tpu.matmul %33, %31, %cst_35 {dimension_numbers = #tpu.dot_dimension_numbers<[1], [0], [0], [1], [0, 0, 1, 1], [], []>} : vector<16x8xf32>, vector<8x36xf32>, vector<16x36xf32> -> vector<16x36xf32>
    %35 = arith.addf %28, %34 : vector<16x36xf32>
    %c0_36 = arith.constant 0 : index
    %c0_37 = arith.constant 0 : index
    %36 = vector.load %arg6[%c0_36, %c0_37] : memref<16x1xf32, #tpu.memory_space<vmem>>, vector<16x1xf32>
    %37 = vector.broadcast %36 : vector<16x1xf32> to vector<16x36xf32>
    %38 = arith.addf %35, %37 : vector<16x36xf32>
    %cst_38 = arith.constant 0.000000e+00 : f32
    %39 = vector.broadcast %cst_38 : f32 to vector<16x36xf32>
    %40 = arith.maximumf %38, %39 : vector<16x36xf32>
    %c0_39 = arith.constant 0 : index
    %c0_40 = arith.constant 0 : index
    %41 = vector.load %arg7[%c0_39, %c0_40] : memref<16x36xf32, #tpu.memory_space<vmem>>, vector<16x36xf32>
    tpu.vector_store %arg7[%c0_39, %c0_40], %40 {strides = array<i32>} : memref<16x36xf32, #tpu.memory_space<vmem>>, vector<16x36xf32>,
    return
  }
  func.func @transform_0(%arg0: i32) -> (i32, i32, i32) {
    %c0_i32 = arith.constant 0 : i32
    %c0_i32_0 = arith.constant 0 : i32
    %c0_i32_1 = arith.constant 0 : i32
    return %arg0, %c0_i32, %c0_i32_0 : i32, i32, i32
  }
  func.func @transform_1(%arg0: i32) -> (i32, i32) {
    %c0_i32 = arith.constant 0 : i32
    %c0_i32_0 = arith.constant 0 : i32
    %c0_i32_1 = arith.constant 0 : i32
    return %c0_i32, %c0_i32_0 : i32, i32
  }
  func.func @transform_2(%arg0: i32) -> (i32, i32) {
    %c0_i32 = arith.constant 0 : i32
    %c0_i32_0 = arith.constant 0 : i32
    %c0_i32_1 = arith.constant 0 : i32
    return %c0_i32, %c0_i32_0 : i32, i32
  }
  func.func @transform_3(%arg0: i32) -> (i32, i32, i32) {
    %c0_i32 = arith.constant 0 : i32
    %c0_i32_0 = arith.constant 0 : i32
    %c0_i32_1 = arith.constant 0 : i32
    %c0_i32_2 = arith.constant 0 : i32
    return %c0_i32, %c0_i32_0, %c0_i32_1 : i32, i32, i32
  }
  func.func @transform_4(%arg0: i32) -> (i32, i32, i32) {
    %c0_i32 = arith.constant 0 : i32
    %c0_i32_0 = arith.constant 0 : i32
    %c0_i32_1 = arith.constant 0 : i32
    %c0_i32_2 = arith.constant 0 : i32
    return %c0_i32, %c0_i32_0, %c0_i32_1 : i32, i32, i32
  }
  func.func @transform_5(%arg0: i32) -> (i32, i32) {
    %c0_i32 = arith.constant 0 : i32
    %c0_i32_0 = arith.constant 0 : i32
    %c0_i32_1 = arith.constant 0 : i32
    return %c0_i32, %c0_i32_0 : i32, i32
  }
  func.func @transform_6(%arg0: i32) -> (i32, i32) {
    %c0_i32 = arith.constant 0 : i32
    %c0_i32_0 = arith.constant 0 : i32
    return %arg0, %c0_i32 : i32, i32
  }
}

module attributes {stable_mosaic.version = 11 : i64} {
  func.func @_fc_stack_kernel(%arg0: memref<72x16xf32, #tpu.memory_space<vmem>>, %arg1: memref<16x120xf32, #tpu.memory_space<vmem>>, %arg2: memref<1x120xf32, #tpu.memory_space<vmem>>, %arg3: memref<120x30xf32, #tpu.memory_space<vmem>>, %arg4: memref<1x30xf32, #tpu.memory_space<vmem>>, %arg5: memref<30x1xf32, #tpu.memory_space<vmem>>, %arg6: memref<1x1xf32, #tpu.memory_space<vmem>>, %arg7: memref<72x1xf32, #tpu.memory_space<vmem>>) attributes {dimension_semantics = [], scalar_prefetch = 0 : i64, scratch_operands = 0 : i64, tpu.core_type = #tpu.core_type<tc>} {
    %c0 = arith.constant 0 : index
    %c0_0 = arith.constant 0 : index
    %0 = vector.load %arg0[%c0, %c0_0] : memref<72x16xf32, #tpu.memory_space<vmem>>, vector<72x16xf32>
    %c0_1 = arith.constant 0 : index
    %c0_2 = arith.constant 0 : index
    %1 = vector.load %arg1[%c0_1, %c0_2] : memref<16x120xf32, #tpu.memory_space<vmem>>, vector<16x120xf32>
    %cst = arith.constant dense<0.000000e+00> : vector<72x120xf32>
    %2 = tpu.matmul %0, %1, %cst {dimension_numbers = #tpu.dot_dimension_numbers<[1], [0], [0], [1], [0, 0, 1, 1], [], []>} : vector<72x16xf32>, vector<16x120xf32>, vector<72x120xf32> -> vector<72x120xf32>
    %c0_3 = arith.constant 0 : index
    %c0_4 = arith.constant 0 : index
    %3 = vector.load %arg2[%c0_3, %c0_4] : memref<1x120xf32, #tpu.memory_space<vmem>>, vector<1x120xf32>
    %4 = vector.broadcast %3 : vector<1x120xf32> to vector<72x120xf32>
    %5 = arith.addf %2, %4 : vector<72x120xf32>
    %cst_5 = arith.constant 0.000000e+00 : f32
    %6 = vector.broadcast %cst_5 : f32 to vector<72x120xf32>
    %7 = arith.maximumf %5, %6 : vector<72x120xf32>
    %c0_6 = arith.constant 0 : index
    %c0_7 = arith.constant 0 : index
    %8 = vector.load %arg3[%c0_6, %c0_7] : memref<120x30xf32, #tpu.memory_space<vmem>>, vector<120x30xf32>
    %cst_8 = arith.constant dense<0.000000e+00> : vector<72x30xf32>
    %9 = tpu.matmul %7, %8, %cst_8 {dimension_numbers = #tpu.dot_dimension_numbers<[1], [0], [0], [1], [0, 0, 1, 1], [], []>} : vector<72x120xf32>, vector<120x30xf32>, vector<72x30xf32> -> vector<72x30xf32>
    %c0_9 = arith.constant 0 : index
    %c0_10 = arith.constant 0 : index
    %10 = vector.load %arg4[%c0_9, %c0_10] : memref<1x30xf32, #tpu.memory_space<vmem>>, vector<1x30xf32>
    %11 = vector.broadcast %10 : vector<1x30xf32> to vector<72x30xf32>
    %12 = arith.addf %9, %11 : vector<72x30xf32>
    %cst_11 = arith.constant 0.000000e+00 : f32
    %13 = vector.broadcast %cst_11 : f32 to vector<72x30xf32>
    %14 = arith.maximumf %12, %13 : vector<72x30xf32>
    %c0_12 = arith.constant 0 : index
    %c0_13 = arith.constant 0 : index
    %15 = vector.load %arg5[%c0_12, %c0_13] : memref<30x1xf32, #tpu.memory_space<vmem>>, vector<30x1xf32>
    %cst_14 = arith.constant dense<0.000000e+00> : vector<72x1xf32>
    %16 = tpu.matmul %14, %15, %cst_14 {dimension_numbers = #tpu.dot_dimension_numbers<[1], [0], [0], [1], [0, 0, 1, 1], [], []>} : vector<72x30xf32>, vector<30x1xf32>, vector<72x1xf32> -> vector<72x1xf32>
    %c0_15 = arith.constant 0 : index
    %c0_16 = arith.constant 0 : index
    %17 = vector.load %arg6[%c0_15, %c0_16] : memref<1x1xf32, #tpu.memory_space<vmem>>, vector<1x1xf32>
    %18 = vector.broadcast %17 : vector<1x1xf32> to vector<72x1xf32>
    %19 = arith.addf %16, %18 : vector<72x1xf32>
    %c0_17 = arith.constant 0 : index
    %c0_18 = arith.constant 0 : index
    %20 = vector.load %arg7[%c0_17, %c0_18] : memref<72x1xf32, #tpu.memory_space<vmem>>, vector<72x1xf32>
    tpu.vector_store %arg7[%c0_17, %c0_18], %19 {strides = array<i32>} : memref<72x1xf32, #tpu.memory_space<vmem>>, vector<72x1xf32>,
    return
  }
}

</mosaic_0001>

<llo_original>
// kernel: cnn_forward.3
$region0: #{cnn_forward.3}
  #allocation0 [shape = 'u32[]', space=smem, size = 0x4, offset = 0x4, fixed_abs, tag = 'smem constant byte address 0x4 - core index']
  #allocation1 [shape = 'u32[144,128]{1,0:T(1,128)}', space=vmem, size = 0x12000, scoped, tag = 'internal scratch']
  #allocation2 [shape = 'f32[1,1]{1,0:T(1,128)S(1)}', space=vmem, size = 0x200, scoped, tag = 'scoped memory for cnn_forward.3']
  %s0 = inlined_call_operand.vmem [shape: f32[72,16], index: 0, kind: input, shape index: {}]
  %s1 = inlined_call_operand.vmem [shape: f32[16,120], index: 1, kind: input, shape index: {}]
  %s2 = inlined_call_operand.vmem [shape: f32[1,120], index: 2, kind: input, shape index: {}]
  %s3 = inlined_call_operand.vmem [shape: f32[120,30], index: 3, kind: input, shape index: {}]
  %s4 = inlined_call_operand.vmem [shape: f32[1,30], index: 4, kind: input, shape index: {}]
  %s5 = inlined_call_operand.vmem [shape: f32[30,1], index: 5, kind: input, shape index: {}]
  %s6 = inlined_call_operand.<no memory space> [shape: f32[1,1], index: 6, kind: input, shape index: {}]
  %s7 = inlined_call_operand.vmem [shape: f32[72,1], index: 7, kind: output, shape index: {}]
  %s8 = sld [smem:[#allocation0]]
  $region38: #{cnn_forward.3} parent=0
    _
  %s10 = ssub.s32 1, %s8
  %s11 = scalar_select 0, %s10, %s8
  %v12 = vstv %s6
  %13 = vst [vmem:[#allocation2] sm:$0x1] %v12
  // Predicated region
  $region2: #{cnn_forward.3} parent=0 // pred_check
    _
  $region3: #{cnn_forward.3} parent=0 // pred_check_branch
    %15 = sbr.rel (0) target = $region5
  $region4: #{cnn_forward.3} parent=0 // pred_region
    _
  $region5: #{cnn_forward.3} parent=0 // pred_fallthru
    _
  // Predicated region
  $region6: #{cnn_forward.3} parent=0 // pred_check
    _
  $region7: #{cnn_forward.3} parent=0 // pred_check_branch
    %17 = sbr.rel (0) target = $region9
  $region8: #{cnn_forward.3} parent=0 // pred_region
    _
  $region9: #{cnn_forward.3} parent=0 // pred_fallthru
    _
  // Predicated region
  $region10: #{cnn_forward.3} parent=0 // pred_check
    _
  $region11: #{cnn_forward.3} parent=0 // pred_check_branch
    %19 = sbr.rel (0) target = $region13
  $region12: #{cnn_forward.3} parent=0 // pred_region
    _
  $region13: #{cnn_forward.3} parent=0 // pred_fallthru
    _
  // Predicated region
  $region14: #{cnn_forward.3} parent=0 // pred_check
    _
  $region15: #{cnn_forward.3} parent=0 // pred_check_branch
    %21 = sbr.rel (0) target = $region17
  $region16: #{cnn_forward.3} parent=0 // pred_region
    _
  $region17: #{cnn_forward.3} parent=0 // pred_fallthru
    _
  // Predicated region
  $region18: #{cnn_forward.3} parent=0 // pred_check
    _
  $region19: #{cnn_forward.3} parent=0 // pred_check_branch
    %23 = sbr.rel (0) target = $region21
  $region20: #{cnn_forward.3} parent=0 // pred_region
    _
  $region21: #{cnn_forward.3} parent=0 // pred_fallthru
    _
  // Predicated region
  $region22: #{cnn_forward.3} parent=0 // pred_check
    _
  $region23: #{cnn_forward.3} parent=0 // pred_check_branch
    %25 = sbr.rel (0) target = $region25
  $region24: #{cnn_forward.3} parent=0 // pred_region
    _
  $region25: #{cnn_forward.3} parent=0 // pred_fallthru
    _
  // Predicated region
  $region26: #{cnn_forward.3} parent=0 // pred_check
    _
  $region27: #{cnn_forward.3} parent=0 // pred_check_branch
    %27 = sbr.rel (0) target = $region29
  $region28: #{cnn_forward.3} parent=0 // pred_region
    _
  $region29: #{cnn_forward.3} parent=0 // pred_fallthru
    _
  %v28 = vld [vmem:[%s0] sm:$0xff]
  %v29 = vld [vmem:[%s0 + $0x8] sm:$0xff]
  %v30 = vld [vmem:[%s0 + $0x10] sm:$0xff]
  %v31 = vld [vmem:[%s0 + $0x18] sm:$0xff]
  %v32 = vld [vmem:[%s0 + $0x20] sm:$0xff]
  %v33 = vld [vmem:[%s0 + $0x28] sm:$0xff]
  %v34 = vld [vmem:[%s0 + $0x30] sm:$0xff]
  %v35 = vld [vmem:[%s0 + $0x38] sm:$0xff]
  %v36 = vld [vmem:[%s0 + $0x40] sm:$0xff]
  %v37 = vld [vmem:[%s1] sm:$0xff]
  %v38 = vld [vmem:[%s1 + $0x8] sm:$0xff]
  %v39 = vld [vmem:[%s2] sm:$0x1]
  %v41 = vlaneseq
  %v42 = vshrl.u32 %v41, 7
  %v43 = vsub.s32 0, %v42
  %v44 = vrot.slane %v39, %v43
  %vm46 = vcmask 130048
  %v48 = vsel %vm46, %v28, 0
  %v51 = vsel %vm46, %v29, 0
  %v54 = vsel %vm46, %v30, 0
  %v57 = vsel %vm46, %v31, 0
  %v60 = vsel %vm46, %v32, 0
  %v63 = vsel %vm46, %v33, 0
  %v66 = vsel %vm46, %v34, 0
  %v69 = vsel %vm46, %v35, 0
  %v72 = vsel %vm46, %v36, 0
  %74 = vmatprep.subr.mxu0 0.0
  %75 = vmatpush1.msra.mxu0 %v37
  %76 = vmatprep.subr.mxu0 0.0
  %77 = vmatpush1.msra.mxu0 %v38
  %78 = vmatprep.subr.mxu0 0.0
  %79 = vmatpush1.msra.mxu0 0.0
  %80 = vmatprep.subr.mxu0 0.0
  %81 = vmatpush1.msra.mxu0 0.0
  %82 = vmatprep.subr.mxu0 0.0
  %83 = vmatpush1.msra.mxu0 0.0
  %84 = vmatprep.subr.mxu0 0.0
  %85 = vmatpush1.msra.mxu0 0.0
  %86 = vmatprep.subr.mxu0 0.0
  %87 = vmatpush1.msra.mxu0 0.0
  %88 = vmatprep.subr.mxu0 0.0
  %89 = vmatpush1.msra.mxu0 0.0
  %90 = vmatprep.subr.mxu0 0.0
  %91 = vmatpush1.msra.mxu0 0.0
  %92 = vmatprep.subr.mxu0 0.0
  %93 = vmatpush1.msra.mxu0 0.0
  %94 = vmatprep.subr.mxu0 0.0
  %95 = vmatpush1.msra.mxu0 0.0
  %96 = vmatprep.subr.mxu0 0.0
  %97 = vmatpush1.msra.mxu0 0.0
  %98 = vmatprep.subr.mxu0 0.0
  %99 = vmatpush1.msra.mxu0 0.0
  %100 = vmatprep.subr.mxu0 0.0
  %101 = vmatpush1.msra.mxu0 0.0
  %102 = vmatprep.subr.mxu0 0.0
  %103 = vmatpush1.msra.mxu0 0.0
  %104 = vmatprep.subr.mxu0 0.0
  %105 = vmatpush1.msra.mxu0 0.0
  %106 = vmatprep.subr.mxu0 0.0
  %107 = vmatpush1.msra.mxu0 0.0
  %108 = vmatprep.subr.mxu0 0.0
  %109 = vmatpush1.msra.mxu0 0.0
  %110 = vmatprep.subr.mxu0 0.0
  %111 = vmatpush1.msra.mxu0 0.0
  %112 = vmatprep.subr.mxu0 0.0
  %113 = vmatpush1.msra.mxu0 0.0
  %114 = vmatprep.subr.mxu0 0.0
  %115 = vmatpush1.msra.mxu0 0.0
  %116 = vmatprep.subr.mxu0 0.0
  %117 = vmatpush1.msra.mxu0 0.0
  %118 = vmatprep.subr.mxu0 0.0
  %119 = vmatpush1.msra.mxu0 0.0
  %120 = vmatprep.subr.mxu0 0.0
  %121 = vmatpush1.msra.mxu0 0.0
  %122 = vmatprep.subr.mxu0 0.0
  %123 = vmatpush1.msra.mxu0 0.0
  %124 = vmatprep.subr.mxu0 0.0
  %125 = vmatpush1.msra.mxu0 0.0
  %126 = vmatprep.subr.mxu0 0.0
  %127 = vmatpush1.msra.mxu0 0.0
  %128 = vmatprep.subr.mxu0 0.0
  %129 = vmatpush1.msra.mxu0 0.0
  %130 = vmatprep.subr.mxu0 0.0
  %131 = vmatpush1.msra.mxu0 0.0
  %132 = vmatprep.subr.mxu0 0.0
  %133 = vmatpush1.msra.mxu0 0.0
  %134 = vmatprep.subr.mxu0 0.0
  %135 = vmatpush1.msra.mxu0 0.0
  %136 = vmatprep.subr.mxu0 0.0
  %137 = vmatpush1.msra.mxu0 0.0
  %138 = vmatprep.mubr.f32.mxu0 0.0
  %139 = vmatmul.mubr.f32.gmra.mrb[0].mxu0 %v48
  %v140 = vpop.f32.mrb[0].mxu0
  %v141 = vadd.f32 %v44, %v140
  %v142 = vpop.f32.mrb[0].mxu0
  %143 = vmatprep.mubr.f32.mxu0 0.0
  %144 = vmatmul.mubr.f32.gmra.mrb[0].mxu0 %v51
  %v145 = vpop.f32.mrb[0].mxu0
  %v146 = vadd.f32 %v44, %v145
  %v147 = vpop.f32.mrb[0].mxu0
  %148 = vmatprep.mubr.f32.mxu0 0.0
  %149 = vmatmul.mubr.f32.gmra.mrb[0].mxu0 %v54
  %v150 = vpop.f32.mrb[0].mxu0
  %v151 = vadd.f32 %v44, %v150
  %v152 = vpop.f32.mrb[0].mxu0
  %153 = vmatprep.mubr.f32.mxu0 0.0
  %154 = vmatmul.mubr.f32.gmra.mrb[0].mxu0 %v57
  %v155 = vpop.f32.mrb[0].mxu0
  %v156 = vadd.f32 %v44, %v155
  %v157 = vpop.f32.mrb[0].mxu0
  %158 = vmatprep.mubr.f32.mxu0 0.0
  %159 = vmatmul.mubr.f32.gmra.mrb[0].mxu0 %v60
  %v160 = vpop.f32.mrb[0].mxu0
  %v161 = vadd.f32 %v44, %v160
  %v162 = vpop.f32.mrb[0].mxu0
  %163 = vmatprep.mubr.f32.mxu0 0.0
  %164 = vmatmul.mubr.f32.gmra.mrb[0].mxu0 %v63
  %v165 = vpop.f32.mrb[0].mxu0
  %v166 = vadd.f32 %v44, %v165
  %v167 = vpop.f32.mrb[0].mxu0
  %168 = vmatprep.mubr.f32.mxu0 0.0
  %169 = vmatmul.mubr.f32.gmra.mrb[0].mxu0 %v66
  %v170 = vpop.f32.mrb[0].mxu0
  %v171 = vadd.f32 %v44, %v170
  %v172 = vpop.f32.mrb[0].mxu0
  %173 = vmatprep.mubr.f32.mxu0 0.0
  %174 = vmatmul.mubr.f32.gmra.mrb[0].mxu0 %v69
  %v175 = vpop.f32.mrb[0].mxu0
  %v176 = vadd.f32 %v44, %v175
  %v177 = vpop.f32.mrb[0].mxu0
  %178 = vmatprep.mubr.f32.mxu0 0.0
  %179 = vmatmul.mubr.f32.gmra.mrb[0].mxu0 %v72
  %v180 = vpop.f32.mrb[0].mxu0
  %v181 = vadd.f32 %v44, %v180
  %v182 = vpop.f32.mrb[0].mxu0
  %183 = vdwg.mxu0
  %v184 = vmax.f32 %v141, 0.0
  %v185 = vmax.f32 %v146, 0.0
  %v186 = vmax.f32 %v151, 0.0
  %v187 = vmax.f32 %v156, 0.0
  %v188 = vmax.f32 %v161, 0.0
  %v189 = vmax.f32 %v166, 0.0
  %v190 = vmax.f32 %v171, 0.0
  %v191 = vmax.f32 %v176, 0.0
  %v192 = vmax.f32 %v181, 0.0
  %v193 = vld [vmem:[%s3] sm:$0xff]
  %v194 = vld [vmem:[%s3 + $0x8] sm:$0xff]
  %v195 = vld [vmem:[%s3 + $0x10] sm:$0xff]
  %v196 = vld [vmem:[%s3 + $0x18] sm:$0xff]
  %v197 = vld [vmem:[%s3 + $0x20] sm:$0xff]
  %v198 = vld [vmem:[%s3 + $0x28] sm:$0xff]
  %v199 = vld [vmem:[%s3 + $0x30] sm:$0xff]
  %v200 = vld [vmem:[%s3 + $0x38] sm:$0xff]
  %v201 = vld [vmem:[%s3 + $0x40] sm:$0xff]
  %v202 = vld [vmem:[%s3 + $0x48] sm:$0xff]
  %v203 = vld [vmem:[%s3 + $0x50] sm:$0xff]
  %v204 = vld [vmem:[%s3 + $0x58] sm:$0xff]
  %v205 = vld [vmem:[%s3 + $0x60] sm:$0xff]
  %v206 = vld [vmem:[%s3 + $0x68] sm:$0xff]
  %v207 = vld [vmem:[%s3 + $0x70] sm:$0xff]
  %v208 = vld [vmem:[%s4] sm:$0x1]
  %v210 = vlaneseq
  %v211 = vshrl.u32 %v210, 7
  %v212 = vsub.s32 0, %v211
  %v213 = vrot.slane %v208, %v212
  %vm215 = vcmask 982016
  %v217 = vsel %vm215, %v184, 0
  %v220 = vsel %vm215, %v185, 0
  %v223 = vsel %vm215, %v186, 0
  %v226 = vsel %vm215, %v187, 0
  %v229 = vsel %vm215, %v188, 0
  %v232 = vsel %vm215, %v189, 0
  %v235 = vsel %vm215, %v190, 0
  %v238 = vsel %vm215, %v191, 0
  %v241 = vsel %vm215, %v192, 0
  %243 = vmatprep.subr.mxu0 0.0
  %244 = vmatpush1.msra.mxu0 %v193
  %245 = vmatprep.subr.mxu0 0.0
  %246 = vmatpush1.msra.mxu0 %v194
  %247 = vmatprep.subr.mxu0 0.0
  %248 = vmatpush1.msra.mxu0 %v195
  %249 = vmatprep.subr.mxu0 0.0
  %250 = vmatpush1.msra.mxu0 %v196
  %251 = vmatprep.subr.mxu0 0.0
  %252 = vmatpush1.msra.mxu0 %v197
  %253 = vmatprep.subr.mxu0 0.0
  %254 = vmatpush1.msra.mxu0 %v198
  %255 = vmatprep.subr.mxu0 0.0
  %256 = vmatpush1.msra.mxu0 %v199
  %257 = vmatprep.subr.mxu0 0.0
  %258 = vmatpush1.msra.mxu0 %v200
  %259 = vmatprep.subr.mxu0 0.0
  %260 = vmatpush1.msra.mxu0 %v201
  %261 = vmatprep.subr.mxu0 0.0
  %262 = vmatpush1.msra.mxu0 %v202
  %263 = vmatprep.subr.mxu0 0.0
  %264 = vmatpush1.msra.mxu0 %v203
  %265 = vmatprep.subr.mxu0 0.0
  %266 = vmatpush1.msra.mxu0 %v204
  %267 = vmatprep.subr.mxu0 0.0
  %268 = vmatpush1.msra.mxu0 %v205
  %269 = vmatprep.subr.mxu0 0.0
  %270 = vmatpush1.msra.mxu0 %v206
  %271 = vmatprep.subr.mxu0 0.0
  %272 = vmatpush1.msra.mxu0 %v207
  %273 = vmatprep.subr.mxu0 0.0
  %274 = vmatpush1.msra.mxu0 0.0
  %275 = vmatprep.subr.mxu0 0.0
  %276 = vmatpush1.msra.mxu0 0.0
  %277 = vmatprep.subr.mxu0 0.0
  %278 = vmatpush1.msra.mxu0 0.0
  %279 = vmatprep.subr.mxu0 0.0
  %280 = vmatpush1.msra.mxu0 0.0
  %281 = vmatprep.subr.mxu0 0.0
  %282 = vmatpush1.msra.mxu0 0.0
  %283 = vmatprep.subr.mxu0 0.0
  %284 = vmatpush1.msra.mxu0 0.0
  %285 = vmatprep.subr.mxu0 0.0
  %286 = vmatpush1.msra.mxu0 0.0
  %287 = vmatprep.subr.mxu0 0.0
  %288 = vmatpush1.msra.mxu0 0.0
  %289 = vmatprep.subr.mxu0 0.0
  %290 = vmatpush1.msra.mxu0 0.0
  %291 = vmatprep.subr.mxu0 0.0
  %292 = vmatpush1.msra.mxu0 0.0
  %293 = vmatprep.subr.mxu0 0.0
  %294 = vmatpush1.msra.mxu0 0.0
  %295 = vmatprep.subr.mxu0 0.0
  %296 = vmatpush1.msra.mxu0 0.0
  %297 = vmatprep.subr.mxu0 0.0
  %298 = vmatpush1.msra.mxu0 0.0
  %299 = vmatprep.subr.mxu0 0.0
  %300 = vmatpush1.msra.mxu0 0.0
  %301 = vmatprep.subr.mxu0 0.0
  %302 = vmatpush1.msra.mxu0 0.0
  %303 = vmatprep.subr.mxu0 0.0
  %304 = vmatpush1.msra.mxu0 0.0
  %305 = vmatprep.subr.mxu0 0.0
  %306 = vmatpush1.msra.mxu0 0.0
  %307 = vmatprep.mubr.f32.mxu0 0.0
  %308 = vmatmul.mubr.f32.gmra.mrb[0].mxu0 %v217
  %v309 = vpop.f32.mrb[0].mxu0
  %v310 = vadd.f32 %v213, %v309
  %v311 = vpop.f32.mrb[0].mxu0
  %312 = vmatprep.mubr.f32.mxu0 0.0
  %313 = vmatmul.mubr.f32.gmra.mrb[0].mxu0 %v220
  %v314 = vpop.f32.mrb[0].mxu0
  %v315 = vadd.f32 %v213, %v314
  %v316 = vpop.f32.mrb[0].mxu0
  %317 = vmatprep.mubr.f32.mxu0 0.0
  %318 = vmatmul.mubr.f32.gmra.mrb[0].mxu0 %v223
  %v319 = vpop.f32.mrb[0].mxu0
  %v320 = vadd.f32 %v213, %v319
  %v321 = vpop.f32.mrb[0].mxu0
  %322 = vmatprep.mubr.f32.mxu0 0.0
  %323 = vmatmul.mubr.f32.gmra.mrb[0].mxu0 %v226
  %v324 = vpop.f32.mrb[0].mxu0
  %v325 = vadd.f32 %v213, %v324
  %v326 = vpop.f32.mrb[0].mxu0
  %327 = vmatprep.mubr.f32.mxu0 0.0
  %328 = vmatmul.mubr.f32.gmra.mrb[0].mxu0 %v229
  %v329 = vpop.f32.mrb[0].mxu0
  %v330 = vadd.f32 %v213, %v329
  %v331 = vpop.f32.mrb[0].mxu0
  %332 = vmatprep.mubr.f32.mxu0 0.0
  %333 = vmatmul.mubr.f32.gmra.mrb[0].mxu0 %v232
  %v334 = vpop.f32.mrb[0].mxu0
  %v335 = vadd.f32 %v213, %v334
  %v336 = vpop.f32.mrb[0].mxu0
  %337 = vmatprep.mubr.f32.mxu0 0.0
  %338 = vmatmul.mubr.f32.gmra.mrb[0].mxu0 %v235
  %v339 = vpop.f32.mrb[0].mxu0
  %v340 = vadd.f32 %v213, %v339
  %v341 = vpop.f32.mrb[0].mxu0
  %342 = vmatprep.mubr.f32.mxu0 0.0
  %343 = vmatmul.mubr.f32.gmra.mrb[0].mxu0 %v238
  %v344 = vpop.f32.mrb[0].mxu0
  %v345 = vadd.f32 %v213, %v344
  %v346 = vpop.f32.mrb[0].mxu0
  %347 = vmatprep.mubr.f32.mxu0 0.0
  %348 = vmatmul.mubr.f32.gmra.mrb[0].mxu0 %v241
  %v349 = vpop.f32.mrb[0].mxu0
  %v350 = vadd.f32 %v213, %v349
  %v351 = vpop.f32.mrb[0].mxu0
  %352 = vdwg.mxu0
  %v353 = vmax.f32 %v310, 0.0
  %v354 = vmax.f32 %v315, 0.0
  %v355 = vmax.f32 %v320, 0.0
  %v356 = vmax.f32 %v325, 0.0
  %v357 = vmax.f32 %v330, 0.0
  %v358 = vmax.f32 %v335, 0.0
  %v359 = vmax.f32 %v340, 0.0
  %v360 = vmax.f32 %v345, 0.0
  %v361 = vmax.f32 %v350, 0.0
  %v362 = vld [vmem:[%s5] sm:$0xff]
  %v363 = vld [vmem:[%s5 + $0x8] sm:$0xff]
  %v364 = vld [vmem:[%s5 + $0x10] sm:$0xff]
  %v365 = vld [vmem:[%s5 + $0x18] sm:$0x3f]
  %v366 = vld [vmem:[#allocation2] sm:$0x1]
  %v368 = vlaneseq
  %v369 = vshrl.u32 %v368, 7
  %v370 = vsub.s32 0, %v369
  %v371 = vrot.slane %v366, %v370
  %vm373 = vcmask 244736
  %v375 = vsel %vm373, %v353, 0
  %v378 = vsel %vm373, %v354, 0
  %v381 = vsel %vm373, %v355, 0
  %v384 = vsel %vm373, %v356, 0
  %v387 = vsel %vm373, %v357, 0
  %v390 = vsel %vm373, %v358, 0
  %v393 = vsel %vm373, %v359, 0
  %v396 = vsel %vm373, %v360, 0
  %v399 = vsel %vm373, %v361, 0
  %vm401 = vcmask 1045504
  %v403 = vsel %vm401, %v365, 0
  %405 = vmatprep.subr.mxu0 0.0
  %406 = vmatpush1.msra.mxu0 %v362
  %407 = vmatprep.subr.mxu0 0.0
  %408 = vmatpush1.msra.mxu0 %v363
  %409 = vmatprep.subr.mxu0 0.0
  %410 = vmatpush1.msra.mxu0 %v364
  %411 = vmatprep.subr.mxu0 0.0
  %412 = vmatpush1.msra.mxu0 %v403
  %413 = vmatprep.subr.mxu0 0.0
  %414 = vmatpush1.msra.mxu0 0.0
  %415 = vmatprep.subr.mxu0 0.0
  %416 = vmatpush1.msra.mxu0 0.0
  %417 = vmatprep.subr.mxu0 0.0
  %418 = vmatpush1.msra.mxu0 0.0
  %419 = vmatprep.subr.mxu0 0.0
  %420 = vmatpush1.msra.mxu0 0.0
  %421 = vmatprep.subr.mxu0 0.0
  %422 = vmatpush1.msra.mxu0 0.0
  %423 = vmatprep.subr.mxu0 0.0
  %424 = vmatpush1.msra.mxu0 0.0
  %425 = vmatprep.subr.mxu0 0.0
  %426 = vmatpush1.msra.mxu0 0.0
  %427 = vmatprep.subr.mxu0 0.0
  %428 = vmatpush1.msra.mxu0 0.0
  %429 = vmatprep.subr.mxu0 0.0
  %430 = vmatpush1.msra.mxu0 0.0
  %431 = vmatprep.subr.mxu0 0.0
  %432 = vmatpush1.msra.mxu0 0.0
  %433 = vmatprep.subr.mxu0 0.0
  %434 = vmatpush1.msra.mxu0 0.0
  %435 = vmatprep.subr.mxu0 0.0
  %436 = vmatpush1.msra.mxu0 0.0
  %437 = vmatprep.subr.mxu0 0.0
  %438 = vmatpush1.msra.mxu0 0.0
  %439 = vmatprep.subr.mxu0 0.0
  %440 = vmatpush1.msra.mxu0 0.0
  %441 = vmatprep.subr.mxu0 0.0
  %442 = vmatpush1.msra.mxu0 0.0
  %443 = vmatprep.subr.mxu0 0.0
  %444 = vmatpush1.msra.mxu0 0.0
  %445 = vmatprep.subr.mxu0 0.0
  %446 = vmatpush1.msra.mxu0 0.0
  %447 = vmatprep.subr.mxu0 0.0
  %448 = vmatpush1.msra.mxu0 0.0
  %449 = vmatprep.subr.mxu0 0.0
  %450 = vmatpush1.msra.mxu0 0.0
  %451 = vmatprep.subr.mxu0 0.0
  %452 = vmatpush1.msra.mxu0 0.0
  %453 = vmatprep.subr.mxu0 0.0
  %454 = vmatpush1.msra.mxu0 0.0
  %455 = vmatprep.subr.mxu0 0.0
  %456 = vmatpush1.msra.mxu0 0.0
  %457 = vmatprep.subr.mxu0 0.0
  %458 = vmatpush1.msra.mxu0 0.0
  %459 = vmatprep.subr.mxu0 0.0
  %460 = vmatpush1.msra.mxu0 0.0
  %461 = vmatprep.subr.mxu0 0.0
  %462 = vmatpush1.msra.mxu0 0.0
  %463 = vmatprep.subr.mxu0 0.0
  %464 = vmatpush1.msra.mxu0 0.0
  %465 = vmatprep.subr.mxu0 0.0
  %466 = vmatpush1.msra.mxu0 0.0
  %467 = vmatprep.subr.mxu0 0.0
  %468 = vmatpush1.msra.mxu0 0.0
  %469 = vmatprep.mubr.f32.mxu0 0.0
  %470 = vmatmul.mubr.f32.gmra.mrb[0].mxu0 %v375
  %v471 = vpop.f32.mrb[0].mxu0
  %v472 = vadd.f32 %v371, %v471
  %v473 = vpop.f32.mrb[0].mxu0
  %474 = vmatprep.mubr.f32.mxu0 0.0
  %475 = vmatmul.mubr.f32.gmra.mrb[0].mxu0 %v378
  %v476 = vpop.f32.mrb[0].mxu0
  %v477 = vadd.f32 %v371, %v476
  %v478 = vpop.f32.mrb[0].mxu0
  %479 = vmatprep.mubr.f32.mxu0 0.0
  %480 = vmatmul.mubr.f32.gmra.mrb[0].mxu0 %v381
  %v481 = vpop.f32.mrb[0].mxu0
  %v482 = vadd.f32 %v371, %v481
  %v483 = vpop.f32.mrb[0].mxu0
  %484 = vmatprep.mubr.f32.mxu0 0.0
  %485 = vmatmul.mubr.f32.gmra.mrb[0].mxu0 %v384
  %v486 = vpop.f32.mrb[0].mxu0
  %v487 = vadd.f32 %v371, %v486
  %v488 = vpop.f32.mrb[0].mxu0
  %489 = vmatprep.mubr.f32.mxu0 0.0
  %490 = vmatmul.mubr.f32.gmra.mrb[0].mxu0 %v387
  %v491 = vpop.f32.mrb[0].mxu0
  %v492 = vadd.f32 %v371, %v491
  %v493 = vpop.f32.mrb[0].mxu0
  %494 = vmatprep.mubr.f32.mxu0 0.0
  %495 = vmatmul.mubr.f32.gmra.mrb[0].mxu0 %v390
  %v496 = vpop.f32.mrb[0].mxu0
  %v497 = vadd.f32 %v371, %v496
  %v498 = vpop.f32.mrb[0].mxu0
  %499 = vmatprep.mubr.f32.mxu0 0.0
  %500 = vmatmul.mubr.f32.gmra.mrb[0].mxu0 %v393
  %v501 = vpop.f32.mrb[0].mxu0
  %v502 = vadd.f32 %v371, %v501
  %v503 = vpop.f32.mrb[0].mxu0
  %504 = vmatprep.mubr.f32.mxu0 0.0
  %505 = vmatmul.mubr.f32.gmra.mrb[0].mxu0 %v396
  %v506 = vpop.f32.mrb[0].mxu0
  %v507 = vadd.f32 %v371, %v506
  %v508 = vpop.f32.mrb[0].mxu0
  %509 = vmatprep.mubr.f32.mxu0 0.0
  %510 = vmatmul.mubr.f32.gmra.mrb[0].mxu0 %v399
  %v511 = vpop.f32.mrb[0].mxu0
  %v512 = vadd.f32 %v371, %v511
  %v513 = vpop.f32.mrb[0].mxu0
  %514 = vdwg.mxu0
  %vm515 = vcmask 7168
  %516 = vst.msk [vmem:[%s7] sm:$0xff] %vm515, %v472
  %517 = vst.msk [vmem:[%s7 + $0x8] sm:$0xff] %vm515, %v477
  %518 = vst.msk [vmem:[%s7 + $0x10] sm:$0xff] %vm515, %v482
  %519 = vst.msk [vmem:[%s7 + $0x18] sm:$0xff] %vm515, %v487
  %520 = vst.msk [vmem:[%s7 + $0x20] sm:$0xff] %vm515, %v492
  %521 = vst.msk [vmem:[%s7 + $0x28] sm:$0xff] %vm515, %v497
  %522 = vst.msk [vmem:[%s7 + $0x30] sm:$0xff] %vm515, %v502
  %523 = vst.msk [vmem:[%s7 + $0x38] sm:$0xff] %vm515, %v507
  %524 = vst.msk [vmem:[%s7 + $0x40] sm:$0xff] %vm515, %v512
  // Predicated region
  $region30: #{cnn_forward.3} parent=0 // pred_check
    _
  $region31: #{cnn_forward.3} parent=0 // pred_check_branch
    %526 = sbr.rel (0) target = $region33
  $region32: #{cnn_forward.3} parent=0 // pred_region
    _
  $region33: #{cnn_forward.3} parent=0 // pred_fallthru
    _
  // Predicated region
  $region34: #{cnn_forward.3} parent=0 // pred_check
    _
  $region35: #{cnn_forward.3} parent=0 // pred_check_branch
    %528 = sbr.rel (0) target = $region37
  $region36: #{cnn_forward.3} parent=0 // pred_region
    _
  $region37: #{cnn_forward.3} parent=0 // pred_fallthru
    _

// kernel: cnn_forward.2
$region0: #{cnn_forward.2}
  #allocation0 [shape = 'u32[]', space=smem, size = 0x4, offset = 0x4, fixed_abs, tag = 'smem constant byte address 0x4 - core index']
  #allocation1 [shape = 'u32[144,128]{1,0:T(1,128)}', space=vmem, size = 0x12000, scoped, tag = 'internal scratch']
  %s0 = inlined_call_operand.vmem [shape: f32[2,128,196], index: 0, kind: input, shape index: {}]
  %s1 = inlined_call_operand.vmem [shape: f32[8,128], index: 1, kind: input, shape index: {}]
  %s2 = inlined_call_operand.vmem [shape: f32[8,1], index: 2, kind: input, shape index: {}]
  %s3 = inlined_call_operand.vmem [shape: f32[4,196,36], index: 3, kind: input, shape index: {}]
  %s4 = inlined_call_operand.vmem [shape: f32[4,16,8], index: 4, kind: input, shape index: {}]
  %s5 = inlined_call_operand.vmem [shape: f32[16,1], index: 5, kind: input, shape index: {}]
  %s6 = inlined_call_operand.vmem [shape: f32[32,36], index: 6, kind: output, shape index: {}]
  %s7 = sld [smem:[#allocation0]]
  $region57: #{cnn_forward.2} parent=0
    _
  %s9 = ssub.s32 1, %s7
  %s10 = scalar_select 0, %s9, %s7
  loop: start=0, step=1, limit=4
  $region2: #{cnn_forward.2} parent=0 // loop_pre_header
    _
  $region3: #{cnn_forward.2} parent=0 // loop_header
    %s12 = sphi 0, %s16
    %p13 = scmp.ge.s32.totalorder %s12, 4
    %s22 = sphi 0, %s24
    %s25 = sphi 0, %s22
    %s26 = sphi 0, %s25
    %s42 = sphi 0, %s26
    %s46 = sphi 0, %s46
    %s48 = sphi 0, %s46
    %s49 = sphi 0, %s48
    %s63 = sphi 0, %s49
    %s67 = sphi 0, %s67
    %s69 = sphi 0, %s67
    %s70 = sphi 0, %s69
    %s84 = sphi 0, %s70
    %s88 = sphi 0, %s88
    %s90 = sphi 0, %s88
    %s91 = sphi 0, %s90
    %s105 = sphi 0, %s91
    %s109 = sphi 0, %s109
    %s111 = sphi 0, %s109
    %s112 = sphi 0, %s111
    %s126 = sphi 0, %s112
    %s130 = sphi 0, %s130
    %s132 = sphi 0, %s130
    %s133 = sphi 0, %s132
    %s147 = sphi 0, %s133
    %s153 = sphi 0, %s155
    %s156 = sphi 0, %s153
    %s157 = sphi 0, %s156
    %s173 = sphi 0, %s157
  $region4: #{cnn_forward.2} parent=0 // loop_header_branch
    %15 = sbr.rel (%p13) target = $region8
  $region5: #{cnn_forward.2} parent=0 // loop_body
    %s17 = ssub.s32 %s12, 1
    %s18 = ssub.s32 %s12, 2
    %s19 = sadd.s32 %s12, 1
    %s20 = ssub.s32 %s12, %s19
    %p21 = scmp.eq.s32.totalorder %s20, 0
    %s23 = sadd.s32 %s22, 1
    %s24 = scalar_select %p21, %s22, %s23
    %p27 = pneg %p21
    %p28 = scmp.eq.s32.totalorder %s12, 1
    %p29 = por %p27, %p28
    %p30 = scmp.ne.s32.totalorder %s22, %s25
    %p31 = scmp.eq.s32.totalorder %s12, 0
    %p32 = por %p30, %p31
    %p33 = scmp.ne.s32.totalorder %s22, %s25
    %p34 = scmp.eq.s32.totalorder %s17, 1
    %p35 = por %p33, %p34
    %p36 = scmp.ne.s32.totalorder %s25, %s26
    %p37 = scmp.eq.s32.totalorder %s17, 0
    %p38 = por %p36, %p37
    %p39 = scmp.ne.s32.totalorder %s25, %s26
    %p40 = scmp.eq.s32.totalorder %s18, 1
    %p41 = por %p39, %p40
    %p43 = scmp.ne.s32.totalorder %s26, %s42
    %p44 = scmp.eq.s32.totalorder %s18, 0
    %p45 = por %p43, %p44
    %s47 = sadd.s32 %s46, 1
    %p50 = scmp.eq.s32.totalorder %s12, 1
    %p51 = scmp.ne.s32.totalorder %s46, %s48
    %p52 = scmp.eq.s32.totalorder %s12, 0
    %p53 = por %p51, %p52
    %p54 = scmp.ne.s32.totalorder %s46, %s48
    %p55 = scmp.eq.s32.totalorder %s17, 1
    %p56 = por %p54, %p55
    %p57 = scmp.ne.s32.totalorder %s48, %s49
    %p58 = scmp.eq.s32.totalorder %s17, 0
    %p59 = por %p57, %p58
    %p60 = scmp.ne.s32.totalorder %s48, %s49
    %p61 = scmp.eq.s32.totalorder %s18, 1
    %p62 = por %p60, %p61
    %p64 = scmp.ne.s32.totalorder %s49, %s63
    %p65 = scmp.eq.s32.totalorder %s18, 0
    %p66 = por %p64, %p65
    %s68 = sadd.s32 %s67, 1
    %p71 = scmp.eq.s32.totalorder %s12, 1
    %p72 = scmp.ne.s32.totalorder %s67, %s69
    %p73 = scmp.eq.s32.totalorder %s12, 0
    %p74 = por %p72, %p73
    %p75 = scmp.ne.s32.totalorder %s67, %s69
    %p76 = scmp.eq.s32.totalorder %s17, 1
    %p77 = por %p75, %p76
    %p78 = scmp.ne.s32.totalorder %s69, %s70
    %p79 = scmp.eq.s32.totalorder %s17, 0
    %p80 = por %p78, %p79
    %p81 = scmp.ne.s32.totalorder %s69, %s70
    %p82 = scmp.eq.s32.totalorder %s18, 1
    %p83 = por %p81, %p82
    %p85 = scmp.ne.s32.totalorder %s70, %s84
    %p86 = scmp.eq.s32.totalorder %s18, 0
    %p87 = por %p85, %p86
    %s89 = sadd.s32 %s88, 1
    %p92 = scmp.eq.s32.totalorder %s12, 1
    %p93 = scmp.ne.s32.totalorder %s88, %s90
    %p94 = scmp.eq.s32.totalorder %s12, 0
    %p95 = por %p93, %p94
    %p96 = scmp.ne.s32.totalorder %s88, %s90
    %p97 = scmp.eq.s32.totalorder %s17, 1
    %p98 = por %p96, %p97
    %p99 = scmp.ne.s32.totalorder %s90, %s91
    %p100 = scmp.eq.s32.totalorder %s17, 0
    %p101 = por %p99, %p100
    %p102 = scmp.ne.s32.totalorder %s90, %s91
    %p103 = scmp.eq.s32.totalorder %s18, 1
    %p104 = por %p102, %p103
    %p106 = scmp.ne.s32.totalorder %s91, %s105
    %p107 = scmp.eq.s32.totalorder %s18, 0
    %p108 = por %p106, %p107
    %s110 = sadd.s32 %s109, 1
    %p113 = scmp.eq.s32.totalorder %s12, 1
    %p114 = scmp.ne.s32.totalorder %s109, %s111
    %p115 = scmp.eq.s32.totalorder %s12, 0
    %p116 = por %p114, %p115
    %p117 = scmp.ne.s32.totalorder %s109, %s111
    %p118 = scmp.eq.s32.totalorder %s17, 1
    %p119 = por %p117, %p118
    %p120 = scmp.ne.s32.totalorder %s111, %s112
    %p121 = scmp.eq.s32.totalorder %s17, 0
    %p122 = por %p120, %p121
    %p123 = scmp.ne.s32.totalorder %s111, %s112
    %p124 = scmp.eq.s32.totalorder %s18, 1
    %p125 = por %p123, %p124
    %p127 = scmp.ne.s32.totalorder %s112, %s126
    %p128 = scmp.eq.s32.totalorder %s18, 0
    %p129 = por %p127, %p128
    %s131 = sadd.s32 %s130, 1
    %p134 = scmp.eq.s32.totalorder %s12, 1
    %p135 = scmp.ne.s32.totalorder %s130, %s132
    %p136 = scmp.eq.s32.totalorder %s12, 0
    %p137 = por %p135, %p136
    %p138 = scmp.ne.s32.totalorder %s130, %s132
    %p139 = scmp.eq.s32.totalorder %s17, 1
    %p140 = por %p138, %p139
    %p141 = scmp.ne.s32.totalorder %s132, %s133
    %p142 = scmp.eq.s32.totalorder %s17, 0
    %p143 = por %p141, %p142
    %p144 = scmp.ne.s32.totalorder %s132, %s133
    %p145 = scmp.eq.s32.totalorder %s18, 1
    %p146 = por %p144, %p145
    %p148 = scmp.ne.s32.totalorder %s133, %s147
    %p149 = scmp.eq.s32.totalorder %s18, 0
    %p150 = por %p148, %p149
    %s151 = ssub.s32 %s12, %s19
    %p152 = scmp.eq.s32.totalorder %s151, 0
    %s154 = sadd.s32 %s153, 1
    %s155 = scalar_select %p152, %s153, %s154
    %p158 = pneg %p152
    %p159 = scmp.eq.s32.totalorder %s12, 1
    %p160 = por %p158, %p159
    %p161 = scmp.ne.s32.totalorder %s153, %s156
    %p162 = scmp.eq.s32.totalorder %s12, 0
    %p163 = por %p161, %p162
    %p164 = scmp.ne.s32.totalorder %s153, %s156
    %p165 = scmp.eq.s32.totalorder %s17, 1
    %p166 = por %p164, %p165
    %p167 = scmp.ne.s32.totalorder %s156, %s157
    %p168 = scmp.eq.s32.totalorder %s17, 0
    %p169 = por %p167, %p168
    %p170 = scmp.ne.s32.totalorder %s156, %s157
    %p171 = scmp.eq.s32.totalorder %s18, 1
    %p172 = por %p170, %p171
    %p174 = scmp.ne.s32.totalorder %s157, %s173
    %p175 = scmp.eq.s32.totalorder %s18, 0
    %p176 = por %p174, %p175
    %p177 = scmp.le.s32.totalorder 1, %s12
    %p178 = scmp.lt.s32.totalorder %s12, 3
    %p179 = pnand %p177, %p178
    %p180 = pneg %p179
    // Predicated region
    $region9: #{cnn_forward.2} parent=5 // pred_check
      _
    $region10: #{cnn_forward.2} parent=5 // pred_check_branch
      %182 = sbr.rel (%p179) target = $region12
    $region11: #{cnn_forward.2} parent=5 // pred_region
      %s183 = ssub.s32 %s12, 1
      // Predicated region
      $region13: #{cnn_forward.2} parent=11 // pred_check
        %p184 = pneg %p59
      $region14: #{cnn_forward.2} parent=11 // pred_check_branch
        %186 = sbr.rel (%p184) target = $region16
      $region15: #{cnn_forward.2} parent=11 // pred_region
        _
      $region16: #{cnn_forward.2} parent=11 // pred_fallthru
        _
      // Predicated region
      $region17: #{cnn_forward.2} parent=11 // pred_check
        %p187 = pneg %p80
      $region18: #{cnn_forward.2} parent=11 // pred_check_branch
        %189 = sbr.rel (%p187) target = $region20
      $region19: #{cnn_forward.2} parent=11 // pred_region
        _
      $region20: #{cnn_forward.2} parent=11 // pred_fallthru
        _
      // Predicated region
      $region21: #{cnn_forward.2} parent=11 // pred_check
        %p190 = pneg %p101
      $region22: #{cnn_forward.2} parent=11 // pred_check_branch
        %192 = sbr.rel (%p190) target = $region24
      $region23: #{cnn_forward.2} parent=11 // pred_region
        _
      $region24: #{cnn_forward.2} parent=11 // pred_fallthru
        _
      // Predicated region
      $region25: #{cnn_forward.2} parent=11 // pred_check
        %p193 = pneg %p122
      $region26: #{cnn_forward.2} parent=11 // pred_check_branch
        %195 = sbr.rel (%p193) target = $region28
      $region27: #{cnn_forward.2} parent=11 // pred_region
        _
      $region28: #{cnn_forward.2} parent=11 // pred_fallthru
        _
      // Predicated region
      $region29: #{cnn_forward.2} parent=11 // pred_check
        %p196 = pneg %p143
      $region30: #{cnn_forward.2} parent=11 // pred_check_branch
        %198 = sbr.rel (%p196) target = $region32
      $region31: #{cnn_forward.2} parent=11 // pred_region
        _
      $region32: #{cnn_forward.2} parent=11 // pred_fallthru
        _
    $region12: #{cnn_forward.2} parent=5 // pred_fallthru
      _
    %p199 = scmp.lt.s32.totalorder %s12, 2
    // Predicated region
    $region33: #{cnn_forward.2} parent=5 // pred_check
      %p200 = pneg %p199
    $region34: #{cnn_forward.2} parent=5 // pred_check_branch
      %202 = sbr.rel (%p200) target = $region36
    $region35: #{cnn_forward.2} parent=5 // pred_region
      // Predicated region
      $region37: #{cnn_forward.2} parent=35 // pred_check
        %p203 = pneg %p32
      $region38: #{cnn_forward.2} parent=35 // pred_check_branch
        %205 = sbr.rel (%p203) target = $region40
      $region39: #{cnn_forward.2} parent=35 // pred_region
        %p206 = scmp.lt.s32.totalorder %s12, 1
        %s207 = scalar_select %p206, %s12, 1
        %s208 = smul.addr %s207, 32
        %s209 = smul.addr %s208, 8
        %s210 = scalar_lea.vmem %s0, %s209
      $region40: #{cnn_forward.2} parent=35 // pred_fallthru
        _
    $region36: #{cnn_forward.2} parent=5 // pred_fallthru
      _
    %p211 = scmp.le.s32.totalorder 1, %s12
    %p212 = scmp.lt.s32.totalorder %s12, 3
    %p213 = pnand %p211, %p212
    %p214 = pneg %p213
    // Predicated region
    $region41: #{cnn_forward.2} parent=5 // pred_check
      _
    $region42: #{cnn_forward.2} parent=5 // pred_check_branch
      %216 = sbr.rel (%p213) target = $region44
    $region43: #{cnn_forward.2} parent=5 // pred_region
      %s217 = ssub.s32 %s12, 1
      %p218 = scmp.lt.s32.totalorder %s17, 1
      %s219 = scalar_select %p218, %s17, 1
      %s220 = smul.addr %s219, 32
      %s221 = smul.addr %s220, 8
      %s222 = scalar_lea.vmem %s0, %s221
      %p223 = pneg %p38
      %p224 = pneg %p35
      %p225 = pneg %p59
      %p226 = pneg %p56
      %p227 = pneg %p80
      %p228 = pneg %p77
      %p229 = pneg %p101
      %p230 = pneg %p98
      %p231 = pneg %p122
      %p232 = pneg %p119
      %p233 = pneg %p143
      %p234 = pneg %p140
      %p235 = pneg %p169
      %p236 = pneg %p166
      %s237 = smul.u32 2, %s17
      %p238 = scmp.lt.s32.totalorder %s237, 3
      %s239 = scalar_select %p238, %s237, 3
      %s240 = smul.addr %s239, 8
      %s241 = scalar_lea.vmem %s6, %s240
      %p242 = scmp.lt.s32.totalorder %s17, 1
      %s243 = scalar_select %p242, %s17, 1
      %s244 = smul.addr %s243, 32
      %s245 = smul.addr %s244, 8
      %s246 = scalar_lea.vmem %s0, %s245
      %s247 = smul.u32 2, %s17
      %p248 = scmp.lt.s32.totalorder %s247, 3
      %s249 = scalar_select %p248, %s247, 3
      %s250 = smul.addr %s249, 8
      %s251 = scalar_lea.vmem %s6, %s250
      %s252 = smul.u32 2, %s17
      %v253 = vld [vmem:[%s246] sm:$0xff]
      %v254 = vld [vmem:[%s246 + $0x8] sm:$0xff]
      %v255 = vld [vmem:[%s246 + $0x10] sm:$0xff]
      %v256 = vld [vmem:[%s246 + $0x18] sm:$0xff]
      %v257 = vld [vmem:[%s246 + $0x20] sm:$0xff]
      %v258 = vld [vmem:[%s246 + $0x28] sm:$0xff]
      %v259 = vld [vmem:[%s246 + $0x30] sm:$0xff]
      %v260 = vld [vmem:[%s246 + $0x38] sm:$0xff]
      %v261 = vld [vmem:[%s246 + $0x40] sm:$0xff]
      %v262 = vld [vmem:[%s246 + $0x48] sm:$0xff]
      %v263 = vld [vmem:[%s246 + $0x50] sm:$0xff]
      %v264 = vld [vmem:[%s246 + $0x58] sm:$0xff]
      %v265 = vld [vmem:[%s246 + $0x60] sm:$0xff]
      %v266 = vld [vmem:[%s246 + $0x68] sm:$0xff]
      %v267 = vld [vmem:[%s246 + $0x70] sm:$0xff]
      %v268 = vld [vmem:[%s246 + $0x78] sm:$0xff]
      %v269 = vld [vmem:[%s246 + $0x80] sm:$0xff]
      %v270 = vld [vmem:[%s246 + $0x88] sm:$0xff]
      %v271 = vld [vmem:[%s246 + $0x90] sm:$0xff]
      %v272 = vld [vmem:[%s246 + $0x98] sm:$0xff]
      %v273 = vld [vmem:[%s246 + $0xa0] sm:$0xff]
      %v274 = vld [vmem:[%s246 + $0xa8] sm:$0xff]
      %v275 = vld [vmem:[%s246 + $0xb0] sm:$0xff]
      %v276 = vld [vmem:[%s246 + $0xb8] sm:$0xff]
      %v277 = vld [vmem:[%s246 + $0xc0] sm:$0xff]
      %v278 = vld [vmem:[%s246 + $0xc8] sm:$0xff]
      %v279 = vld [vmem:[%s246 + $0xd0] sm:$0xff]
      %v280 = vld [vmem:[%s246 + $0xd8] sm:$0xff]
      %v281 = vld [vmem:[%s246 + $0xe0] sm:$0xff]
      %v282 = vld [vmem:[%s246 + $0xe8] sm:$0xff]
      %v283 = vld [vmem:[%s246 + $0xf0] sm:$0xff]
      %v284 = vld [vmem:[%s246 + $0xf8] sm:$0xff]
      %v285 = vld [vmem:[%s1] sm:$0xff]
      %v286 = vld [vmem:[%s2] sm:$0xff]
      %288 = vset.pattern.permute.xlu0 0
      %289 = vperm.xlu0 %288, %v286
      %v290 = vpop.permute.xlu0 %289
      %292 = vmatprep.subr.mxu0 %v254
      %293 = vmatpush1.msra.mxu0 %v253
      %294 = vmatprep.subr.mxu0 %v256
      %295 = vmatpush1.msra.mxu0 %v255
      %296 = vmatprep.subr.mxu0 %v258
      %297 = vmatpush1.msra.mxu0 %v257
      %298 = vmatprep.subr.mxu0 %v260
      %299 = vmatpush1.msra.mxu0 %v259
      %300 = vmatprep.subr.mxu0 %v262
      %301 = vmatpush1.msra.mxu0 %v261
      %302 = vmatprep.subr.mxu0 %v264
      %303 = vmatpush1.msra.mxu0 %v263
      %304 = vmatprep.subr.mxu0 %v266
      %305 = vmatpush1.msra.mxu0 %v265
      %306 = vmatprep.subr.mxu0 %v268
      %307 = vmatpush1.msra.mxu0 %v267
      %308 = vmatprep.subr.mxu0 %v270
      %309 = vmatpush1.msra.mxu0 %v269
      %310 = vmatprep.subr.mxu0 %v272
      %311 = vmatpush1.msra.mxu0 %v271
      %312 = vmatprep.subr.mxu0 %v274
      %313 = vmatpush1.msra.mxu0 %v273
      %314 = vmatprep.subr.mxu0 %v276
      %315 = vmatpush1.msra.mxu0 %v275
      %316 = vmatprep.subr.mxu0 %v278
      %317 = vmatpush1.msra.mxu0 %v277
      %318 = vmatprep.subr.mxu0 %v280
      %319 = vmatpush1.msra.mxu0 %v279
      %320 = vmatprep.subr.mxu0 %v282
      %321 = vmatpush1.msra.mxu0 %v281
      %322 = vmatprep.subr.mxu0 %v284
      %323 = vmatpush1.msra.mxu0 %v283
      %324 = vmatprep.subr.mxu0 0.0
      %325 = vmatpush1.msra.mxu0 0.0
      %326 = vmatprep.subr.mxu0 0.0
      %327 = vmatpush1.msra.mxu0 0.0
      %328 = vmatprep.subr.mxu0 0.0
      %329 = vmatpush1.msra.mxu0 0.0
      %330 = vmatprep.subr.mxu0 0.0
      %331 = vmatpush1.msra.mxu0 0.0
      %332 = vmatprep.subr.mxu0 0.0
      %333 = vmatpush1.msra.mxu0 0.0
      %334 = vmatprep.subr.mxu0 0.0
      %335 = vmatpush1.msra.mxu0 0.0
      %336 = vmatprep.subr.mxu0 0.0
      %337 = vmatpush1.msra.mxu0 0.0
      %338 = vmatprep.subr.mxu0 0.0
      %339 = vmatpush1.msra.mxu0 0.0
      %340 = vmatprep.subr.mxu0 0.0
      %341 = vmatpush1.msra.mxu0 0.0
      %342 = vmatprep.subr.mxu0 0.0
      %343 = vmatpush1.msra.mxu0 0.0
      %344 = vmatprep.subr.mxu0 0.0
      %345 = vmatpush1.msra.mxu0 0.0
      %346 = vmatprep.subr.mxu0 0.0
      %347 = vmatpush1.msra.mxu0 0.0
      %348 = vmatprep.subr.mxu0 0.0
      %349 = vmatpush1.msra.mxu0 0.0
      %350 = vmatprep.subr.mxu0 0.0
      %351 = vmatpush1.msra.mxu0 0.0
      %352 = vmatprep.subr.mxu0 0.0
      %353 = vmatpush1.msra.mxu0 0.0
      %354 = vmatprep.subr.mxu0 0.0
      %355 = vmatpush1.msra.mxu0 0.0
      %356 = vmatprep.mubr.f32.mxu0 0.0
      %357 = vmatmul.mubr.f32.gmra.mrb[0].mxu0 %v285
      %v358 = vpop.f32.mrb[0].mxu0
      %v359 = vadd.f32 %v290, %v358
      %v360 = vpop.f32.mrb[0].mxu0
      %v361 = vadd.f32 %v290, %v360
      %362 = vdwg.mxu0
      %v363 = vmax.f32 %v359, 0.0
      %v364 = vmax.f32 %v361, 0.0
      %v365 = vld [vmem:[%s3] sm:$0xff]
      %v366 = vld [vmem:[%s3 + $0x8] sm:$0xff]
      %v367 = vld [vmem:[%s3 + $0x10] sm:$0xff]
      %v368 = vld [vmem:[%s3 + $0x18] sm:$0xff]
      %v369 = vld [vmem:[%s3 + $0x20] sm:$0xff]
      %v370 = vld [vmem:[%s3 + $0x28] sm:$0xff]
      %v371 = vld [vmem:[%s3 + $0x30] sm:$0xff]
      %v372 = vld [vmem:[%s3 + $0x38] sm:$0xff]
      %v373 = vld [vmem:[%s3 + $0x40] sm:$0xff]
      %v374 = vld [vmem:[%s3 + $0x48] sm:$0xff]
      %v375 = vld [vmem:[%s3 + $0x50] sm:$0xff]
      %v376 = vld [vmem:[%s3 + $0x58] sm:$0xff]
      %v377 = vld [vmem:[%s3 + $0x60] sm:$0xff]
      %v378 = vld [vmem:[%s3 + $0x68] sm:$0xff]
      %v379 = vld [vmem:[%s3 + $0x70] sm:$0xff]
      %v380 = vld [vmem:[%s3 + $0x78] sm:$0xff]
      %v381 = vld [vmem:[%s3 + $0x80] sm:$0xff]
      %v382 = vld [vmem:[%s3 + $0x88] sm:$0xff]
      %v383 = vld [vmem:[%s3 + $0x90] sm:$0xff]
      %v384 = vld [vmem:[%s3 + $0x98] sm:$0xff]
      %v385 = vld [vmem:[%s3 + $0xa0] sm:$0xff]
      %v386 = vld [vmem:[%s3 + $0xa8] sm:$0xff]
      %v387 = vld [vmem:[%s3 + $0xb0] sm:$0xff]
      %v388 = vld [vmem:[%s3 + $0xb8] sm:$0xff]
      %v389 = vld [vmem:[%s3 + $0xc0] sm:$0xf]
      %vm390 = vcmask 556032
      %v392 = vsel %vm390, %v364, 0
      %vm394 = vcmask 1043456
      %v396 = vsel %vm394, %v389, 0
      %398 = vmatprep.subr.mxu0 0.0
      %399 = vmatpush1.msra.mxu0 %v365
      %400 = vmatprep.subr.mxu0 0.0
      %401 = vmatpush1.msra.mxu0 %v366
      %402 = vmatprep.subr.mxu0 0.0
      %403 = vmatpush1.msra.mxu0 %v367
      %404 = vmatprep.subr.mxu0 0.0
      %405 = vmatpush1.msra.mxu0 %v368
      %406 = vmatprep.subr.mxu0 0.0
      %407 = vmatpush1.msra.mxu0 %v369
      %408 = vmatprep.subr.mxu0 0.0
      %409 = vmatpush1.msra.mxu0 %v370
      %410 = vmatprep.subr.mxu0 0.0
      %411 = vmatpush1.msra.mxu0 %v371
      %412 = vmatprep.subr.mxu0 0.0
      %413 = vmatpush1.msra.mxu0 %v372
      %414 = vmatprep.subr.mxu0 0.0
      %415 = vmatpush1.msra.mxu0 %v373
      %416 = vmatprep.subr.mxu0 0.0
      %417 = vmatpush1.msra.mxu0 %v374
      %418 = vmatprep.subr.mxu0 0.0
      %419 = vmatpush1.msra.mxu0 %v375
      %420 = vmatprep.subr.mxu0 0.0
      %421 = vmatpush1.msra.mxu0 %v376
      %422 = vmatprep.subr.mxu0 0.0
      %423 = vmatpush1.msra.mxu0 %v377
      %424 = vmatprep.subr.mxu0 0.0
      %425 = vmatpush1.msra.mxu0 %v378
      %426 = vmatprep.subr.mxu0 0.0
      %427 = vmatpush1.msra.mxu0 %v379
      %428 = vmatprep.subr.mxu0 0.0
      %429 = vmatpush1.msra.mxu0 %v380
      %430 = vmatprep.subr.mxu0 0.0
      %431 = vmatpush1.msra.mxu0 %v381
      %432 = vmatprep.subr.mxu0 0.0
      %433 = vmatpush1.msra.mxu0 %v382
      %434 = vmatprep.subr.mxu0 0.0
      %435 = vmatpush1.msra.mxu0 %v383
      %436 = vmatprep.subr.mxu0 0.0
      %437 = vmatpush1.msra.mxu0 %v384
      %438 = vmatprep.subr.mxu0 0.0
      %439 = vmatpush1.msra.mxu0 %v385
      %440 = vmatprep.subr.mxu0 0.0
      %441 = vmatpush1.msra.mxu0 %v386
      %442 = vmatprep.subr.mxu0 0.0
      %443 = vmatpush1.msra.mxu0 %v387
      %444 = vmatprep.subr.mxu0 0.0
      %445 = vmatpush1.msra.mxu0 %v388
      %446 = vmatprep.subr.mxu0 0.0
      %447 = vmatpush1.msra.mxu0 %v396
      %448 = vmatprep.subr.mxu0 0.0
      %449 = vmatpush1.msra.mxu0 0.0
      %450 = vmatprep.subr.mxu0 0.0
      %451 = vmatpush1.msra.mxu0 0.0
      %452 = vmatprep.subr.mxu0 0.0
      %453 = vmatpush1.msra.mxu0 0.0
      %454 = vmatprep.subr.mxu0 0.0
      %455 = vmatpush1.msra.mxu0 0.0
      %456 = vmatprep.subr.mxu0 0.0
      %457 = vmatpush1.msra.mxu0 0.0
      %458 = vmatprep.subr.mxu0 0.0
      %459 = vmatpush1.msra.mxu0 0.0
      %460 = vmatprep.subr.mxu0 0.0
      %461 = vmatpush1.msra.mxu0 0.0
      %462 = vmatprep.mubr.f32.mxu0 %v392
      %463 = vmatmul.mubr.f32.gmra.mrb[0].mxu0 %v363
      %v464 = vpop.f32.mrb[0].mxu0
      %v465 = vadd.f32 0.0, %v464
      %v466 = vpop.f32.mrb[0].mxu0
      %467 = vdwg.mxu0
      %v468 = vld [vmem:[%s4] sm:$0xff]
      %v469 = vld [vmem:[%s4 + $0x8] sm:$0xff]
      %s470 = scalar_lea.vmem %s3, 200
      %v471 = vld [vmem:[%s470] sm:$0xff]
      %v472 = vld [vmem:[%s470 + $0x8] sm:$0xff]
      %v473 = vld [vmem:[%s470 + $0x10] sm:$0xff]
      %v474 = vld [vmem:[%s470 + $0x18] sm:$0xff]
      %v475 = vld [vmem:[%s470 + $0x20] sm:$0xff]
      %v476 = vld [vmem:[%s470 + $0x28] sm:$0xff]
      %v477 = vld [vmem:[%s470 + $0x30] sm:$0xff]
      %v478 = vld [vmem:[%s470 + $0x38] sm:$0xff]
      %v479 = vld [vmem:[%s470 + $0x40] sm:$0xff]
      %v480 = vld [vmem:[%s470 + $0x48] sm:$0xff]
      %v481 = vld [vmem:[%s470 + $0x50] sm:$0xff]
      %v482 = vld [vmem:[%s470 + $0x58] sm:$0xff]
      %v483 = vld [vmem:[%s470 + $0x60] sm:$0xff]
      %v484 = vld [vmem:[%s470 + $0x68] sm:$0xff]
      %v485 = vld [vmem:[%s470 + $0x70] sm:$0xff]
      %v486 = vld [vmem:[%s470 + $0x78] sm:$0xff]
      %v487 = vld [vmem:[%s470 + $0x80] sm:$0xff]
      %v488 = vld [vmem:[%s470 + $0x88] sm:$0xff]
      %v489 = vld [vmem:[%s470 + $0x90] sm:$0xff]
      %v490 = vld [vmem:[%s470 + $0x98] sm:$0xff]
      %v491 = vld [vmem:[%s470 + $0xa0] sm:$0xff]
      %v492 = vld [vmem:[%s470 + $0xa8] sm:$0xff]
      %v493 = vld [vmem:[%s470 + $0xb0] sm:$0xff]
      %v494 = vld [vmem:[%s470 + $0xb8] sm:$0xff]
      %v495 = vld [vmem:[%s470 + $0xc0] sm:$0xf]
      %v497 = vsel %vm394, %v495, 0
      %499 = vmatprep.subr.mxu0 0.0
      %500 = vmatpush1.msra.mxu0 %v471
      %501 = vmatprep.subr.mxu0 0.0
      %502 = vmatpush1.msra.mxu0 %v472
      %503 = vmatprep.subr.mxu0 0.0
      %504 = vmatpush1.msra.mxu0 %v473
      %505 = vmatprep.subr.mxu0 0.0
      %506 = vmatpush1.msra.mxu0 %v474
      %507 = vmatprep.subr.mxu0 0.0
      %508 = vmatpush1.msra.mxu0 %v475
      %509 = vmatprep.subr.mxu0 0.0
      %510 = vmatpush1.msra.mxu0 %v476
      %511 = vmatprep.subr.mxu0 0.0
      %512 = vmatpush1.msra.mxu0 %v477
      %513 = vmatprep.subr.mxu0 0.0
      %514 = vmatpush1.msra.mxu0 %v478
      %515 = vmatprep.subr.mxu0 0.0
      %516 = vmatpush1.msra.mxu0 %v479
      %517 = vmatprep.subr.mxu0 0.0
      %518 = vmatpush1.msra.mxu0 %v480
      %519 = vmatprep.subr.mxu0 0.0
      %520 = vmatpush1.msra.mxu0 %v481
      %521 = vmatprep.subr.mxu0 0.0
      %522 = vmatpush1.msra.mxu0 %v482
      %523 = vmatprep.subr.mxu0 0.0
      %524 = vmatpush1.msra.mxu0 %v483
      %525 = vmatprep.subr.mxu0 0.0
      %526 = vmatpush1.msra.mxu0 %v484
      %527 = vmatprep.subr.mxu0 0.0
      %528 = vmatpush1.msra.mxu0 %v485
      %529 = vmatprep.subr.mxu0 0.0
      %530 = vmatpush1.msra.mxu0 %v486
      %531 = vmatprep.subr.mxu0 0.0
      %532 = vmatpush1.msra.mxu0 %v487
      %533 = vmatprep.subr.mxu0 0.0
      %534 = vmatpush1.msra.mxu0 %v488
      %535 = vmatprep.subr.mxu0 0.0
      %536 = vmatpush1.msra.mxu0 %v489
      %537 = vmatprep.subr.mxu0 0.0
      %538 = vmatpush1.msra.mxu0 %v490
      %539 = vmatprep.subr.mxu0 0.0
      %540 = vmatpush1.msra.mxu0 %v491
      %541 = vmatprep.subr.mxu0 0.0
      %542 = vmatpush1.msra.mxu0 %v492
      %543 = vmatprep.subr.mxu0 0.0
      %544 = vmatpush1.msra.mxu0 %v493
      %545 = vmatprep.subr.mxu0 0.0
      %546 = vmatpush1.msra.mxu0 %v494
      %547 = vmatprep.subr.mxu0 0.0
      %548 = vmatpush1.msra.mxu0 %v497
      %549 = vmatprep.subr.mxu0 0.0
      %550 = vmatpush1.msra.mxu0 0.0
      %551 = vmatprep.subr.mxu0 0.0
      %552 = vmatpush1.msra.mxu0 0.0
      %553 = vmatprep.subr.mxu0 0.0
      %554 = vmatpush1.msra.mxu0 0.0
      %555 = vmatprep.subr.mxu0 0.0
      %556 = vmatpush1.msra.mxu0 0.0
      %557 = vmatprep.subr.mxu0 0.0
      %558 = vmatpush1.msra.mxu0 0.0
      %559 = vmatprep.subr.mxu0 0.0
      %560 = vmatpush1.msra.mxu0 0.0
      %561 = vmatprep.subr.mxu0 0.0
      %562 = vmatpush1.msra.mxu0 0.0
      %563 = vmatprep.mubr.f32.mxu0 %v392
      %564 = vmatmul.mubr.f32.gmra.mrb[0].mxu0 %v363
      %v565 = vpop.f32.mrb[0].mxu0
      %v566 = vadd.f32 0.0, %v565
      %v567 = vpop.f32.mrb[0].mxu0
      %568 = vdwg.mxu0
      %s569 = scalar_lea.vmem %s4, 16
      %v570 = vld [vmem:[%s569] sm:$0xff]
      %v571 = vld [vmem:[%s569 + $0x8] sm:$0xff]
      %vm572 = vcmask 64512
      %v574 = vsel %vm572, %v570, 0
      %v577 = vsel %vm572, %v571, 0
      %579 = vmatprep.subr.mxu0 0.0
      %580 = vmatpush1.msra.mxu0 %v566
      %581 = vmatprep.subr.mxu0 0.0
      %582 = vmatpush1.msra.mxu0 0.0
      %583 = vmatprep.subr.mxu0 0.0
      %584 = vmatpush1.msra.mxu0 0.0
      %585 = vmatprep.subr.mxu0 0.0
      %586 = vmatpush1.msra.mxu0 0.0
      %587 = vmatprep.subr.mxu0 0.0
      %588 = vmatpush1.msra.mxu0 0.0
      %589 = vmatprep.subr.mxu0 0.0
      %590 = vmatpush1.msra.mxu0 0.0
      %591 = vmatprep.subr.mxu0 0.0
      %592 = vmatpush1.msra.mxu0 0.0
      %593 = vmatprep.subr.mxu0 0.0
      %594 = vmatpush1.msra.mxu0 0.0
      %595 = vmatprep.subr.mxu0 0.0
      %596 = vmatpush1.msra.mxu0 0.0
      %597 = vmatprep.subr.mxu0 0.0
      %598 = vmatpush1.msra.mxu0 0.0
      %599 = vmatprep.subr.mxu0 0.0
      %600 = vmatpush1.msra.mxu0 0.0
      %601 = vmatprep.subr.mxu0 0.0
      %602 = vmatpush1.msra.mxu0 0.0
      %603 = vmatprep.subr.mxu0 0.0
      %604 = vmatpush1.msra.mxu0 0.0
      %605 = vmatprep.subr.mxu0 0.0
      %606 = vmatpush1.msra.mxu0 0.0
      %607 = vmatprep.subr.mxu0 0.0
      %608 = vmatpush1.msra.mxu0 0.0
      %609 = vmatprep.subr.mxu0 0.0
      %610 = vmatpush1.msra.mxu0 0.0
      %611 = vmatprep.subr.mxu0 0.0
      %612 = vmatpush1.msra.mxu0 0.0
      %613 = vmatprep.subr.mxu0 0.0
      %614 = vmatpush1.msra.mxu0 0.0
      %615 = vmatprep.subr.mxu0 0.0
      %616 = vmatpush1.msra.mxu0 0.0
      %617 = vmatprep.subr.mxu0 0.0
      %618 = vmatpush1.msra.mxu0 0.0
      %619 = vmatprep.subr.mxu0 0.0
      %620 = vmatpush1.msra.mxu0 0.0
      %621 = vmatprep.subr.mxu0 0.0
      %622 = vmatpush1.msra.mxu0 0.0
      %623 = vmatprep.subr.mxu0 0.0
      %624 = vmatpush1.msra.mxu0 0.0
      %625 = vmatprep.subr.mxu0 0.0
      %626 = vmatpush1.msra.mxu0 0.0
      %627 = vmatprep.subr.mxu0 0.0
      %628 = vmatpush1.msra.mxu0 0.0
      %629 = vmatprep.subr.mxu0 0.0
      %630 = vmatpush1.msra.mxu0 0.0
      %631 = vmatprep.subr.mxu0 0.0
      %632 = vmatpush1.msra.mxu0 0.0
      %633 = vmatprep.subr.mxu0 0.0
      %634 = vmatpush1.msra.mxu0 0.0
      %635 = vmatprep.subr.mxu0 0.0
      %636 = vmatpush1.msra.mxu0 0.0
      %637 = vmatprep.subr.mxu0 0.0
      %638 = vmatpush1.msra.mxu0 0.0
      %639 = vmatprep.subr.mxu0 0.0
      %640 = vmatpush1.msra.mxu0 0.0
      %641 = vmatprep.subr.mxu0 0.0
      %642 = vmatpush1.msra.mxu0 0.0
      %643 = vmatprep.mubr.f32.mxu0 0.0
      %644 = vmatmul.mubr.f32.gmra.mrb[0].mxu0 %v574
      %v645 = vpop.f32.mrb[0].mxu0
      %v646 = vadd.f32 0.0, %v645
      %v647 = vpop.f32.mrb[0].mxu0
      %648 = vmatprep.mubr.f32.mxu0 0.0
      %649 = vmatmul.mubr.f32.gmra.mrb[0].mxu0 %v577
      %v650 = vpop.f32.mrb[0].mxu0
      %v651 = vadd.f32 0.0, %v650
      %v652 = vpop.f32.mrb[0].mxu0
      %653 = vdwg.mxu0
      %v655 = vsel %vm572, %v468, 0
      %v658 = vsel %vm572, %v469, 0
      %660 = vmatprep.subr.mxu0 0.0
      %661 = vmatpush1.msra.mxu0 %v465
      %662 = vmatprep.subr.mxu0 0.0
      %663 = vmatpush1.msra.mxu0 0.0
      %664 = vmatprep.subr.mxu0 0.0
      %665 = vmatpush1.msra.mxu0 0.0
      %666 = vmatprep.subr.mxu0 0.0
      %667 = vmatpush1.msra.mxu0 0.0
      %668 = vmatprep.subr.mxu0 0.0
      %669 = vmatpush1.msra.mxu0 0.0
      %670 = vmatprep.subr.mxu0 0.0
      %671 = vmatpush1.msra.mxu0 0.0
      %672 = vmatprep.subr.mxu0 0.0
      %673 = vmatpush1.msra.mxu0 0.0
      %674 = vmatprep.subr.mxu0 0.0
      %675 = vmatpush1.msra.mxu0 0.0
      %676 = vmatprep.subr.mxu0 0.0
      %677 = vmatpush1.msra.mxu0 0.0
      %678 = vmatprep.subr.mxu0 0.0
      %679 = vmatpush1.msra.mxu0 0.0
      %680 = vmatprep.subr.mxu0 0.0
      %681 = vmatpush1.msra.mxu0 0.0
      %682 = vmatprep.subr.mxu0 0.0
      %683 = vmatpush1.msra.mxu0 0.0
      %684 = vmatprep.subr.mxu0 0.0
      %685 = vmatpush1.msra.mxu0 0.0
      %686 = vmatprep.subr.mxu0 0.0
      %687 = vmatpush1.msra.mxu0 0.0
      %688 = vmatprep.subr.mxu0 0.0
      %689 = vmatpush1.msra.mxu0 0.0
      %690 = vmatprep.subr.mxu0 0.0
      %691 = vmatpush1.msra.mxu0 0.0
      %692 = vmatprep.subr.mxu0 0.0
      %693 = vmatpush1.msra.mxu0 0.0
      %694 = vmatprep.subr.mxu0 0.0
      %695 = vmatpush1.msra.mxu0 0.0
      %696 = vmatprep.subr.mxu0 0.0
      %697 = vmatpush1.msra.mxu0 0.0
      %698 = vmatprep.subr.mxu0 0.0
      %699 = vmatpush1.msra.mxu0 0.0
      %700 = vmatprep.subr.mxu0 0.0
      %701 = vmatpush1.msra.mxu0 0.0
      %702 = vmatprep.subr.mxu0 0.0
      %703 = vmatpush1.msra.mxu0 0.0
      %704 = vmatprep.subr.mxu0 0.0
      %705 = vmatpush1.msra.mxu0 0.0
      %706 = vmatprep.subr.mxu0 0.0
      %707 = vmatpush1.msra.mxu0 0.0
      %708 = vmatprep.subr.mxu0 0.0
      %709 = vmatpush1.msra.mxu0 0.0
      %710 = vmatprep.subr.mxu0 0.0
      %711 = vmatpush1.msra.mxu0 0.0
      %712 = vmatprep.subr.mxu0 0.0
      %713 = vmatpush1.msra.mxu0 0.0
      %714 = vmatprep.subr.mxu0 0.0
      %715 = vmatpush1.msra.mxu0 0.0
      %716 = vmatprep.subr.mxu0 0.0
      %717 = vmatpush1.msra.mxu0 0.0
      %718 = vmatprep.subr.mxu0 0.0
      %719 = vmatpush1.msra.mxu0 0.0
      %720 = vmatprep.subr.mxu0 0.0
      %721 = vmatpush1.msra.mxu0 0.0
      %722 = vmatprep.subr.mxu0 0.0
      %723 = vmatpush1.msra.mxu0 0.0
      %724 = vmatprep.mubr.f32.mxu0 0.0
      %725 = vmatmul.mubr.f32.gmra.mrb[0].mxu0 %v655
      %v726 = vpop.f32.mrb[0].mxu0
      %v727 = vadd.f32 %v646, %v726
      %v728 = vpop.f32.mrb[0].mxu0
      %729 = vmatprep.mubr.f32.mxu0 0.0
      %730 = vmatmul.mubr.f32.gmra.mrb[0].mxu0 %v658
      %v731 = vpop.f32.mrb[0].mxu0
      %v732 = vadd.f32 %v651, %v731
      %v733 = vpop.f32.mrb[0].mxu0
      %734 = vdwg.mxu0
      %s735 = scalar_lea.vmem %s3, 400
      %v736 = vld [vmem:[%s735] sm:$0xff]
      %v737 = vld [vmem:[%s735 + $0x8] sm:$0xff]
      %v738 = vld [vmem:[%s735 + $0x10] sm:$0xff]
      %v739 = vld [vmem:[%s735 + $0x18] sm:$0xff]
      %v740 = vld [vmem:[%s735 + $0x20] sm:$0xff]
      %v741 = vld [vmem:[%s735 + $0x28] sm:$0xff]
      %v742 = vld [vmem:[%s735 + $0x30] sm:$0xff]
      %v743 = vld [vmem:[%s735 + $0x38] sm:$0xff]
      %v744 = vld [vmem:[%s735 + $0x40] sm:$0xff]
      %v745 = vld [vmem:[%s735 + $0x48] sm:$0xff]
      %v746 = vld [vmem:[%s735 + $0x50] sm:$0xff]
      %v747 = vld [vmem:[%s735 + $0x58] sm:$0xff]
      %v748 = vld [vmem:[%s735 + $0x60] sm:$0xff]
      %v749 = vld [vmem:[%s735 + $0x68] sm:$0xff]
      %v750 = vld [vmem:[%s735 + $0x70] sm:$0xff]
      %v751 = vld [vmem:[%s735 + $0x78] sm:$0xff]
      %v752 = vld [vmem:[%s735 + $0x80] sm:$0xff]
      %v753 = vld [vmem:[%s735 + $0x88] sm:$0xff]
      %v754 = vld [vmem:[%s735 + $0x90] sm:$0xff]
      %v755 = vld [vmem:[%s735 + $0x98] sm:$0xff]
      %v756 = vld [vmem:[%s735 + $0xa0] sm:$0xff]
      %v757 = vld [vmem:[%s735 + $0xa8] sm:$0xff]
      %v758 = vld [vmem:[%s735 + $0xb0] sm:$0xff]
      %v759 = vld [vmem:[%s735 + $0xb8] sm:$0xff]
      %v760 = vld [vmem:[%s735 + $0xc0] sm:$0xf]
      %v762 = vsel %vm394, %v760, 0
      %764 = vmatprep.subr.mxu0 0.0
      %765 = vmatpush1.msra.mxu0 %v736
      %766 = vmatprep.subr.mxu0 0.0
      %767 = vmatpush1.msra.mxu0 %v737
      %768 = vmatprep.subr.mxu0 0.0
      %769 = vmatpush1.msra.mxu0 %v738
      %770 = vmatprep.subr.mxu0 0.0
      %771 = vmatpush1.msra.mxu0 %v739
      %772 = vmatprep.subr.mxu0 0.0
      %773 = vmatpush1.msra.mxu0 %v740
      %774 = vmatprep.subr.mxu0 0.0
      %775 = vmatpush1.msra.mxu0 %v741
      %776 = vmatprep.subr.mxu0 0.0
      %777 = vmatpush1.msra.mxu0 %v742
      %778 = vmatprep.subr.mxu0 0.0
      %779 = vmatpush1.msra.mxu0 %v743
      %780 = vmatprep.subr.mxu0 0.0
      %781 = vmatpush1.msra.mxu0 %v744
      %782 = vmatprep.subr.mxu0 0.0
      %783 = vmatpush1.msra.mxu0 %v745
      %784 = vmatprep.subr.mxu0 0.0
      %785 = vmatpush1.msra.mxu0 %v746
      %786 = vmatprep.subr.mxu0 0.0
      %787 = vmatpush1.msra.mxu0 %v747
      %788 = vmatprep.subr.mxu0 0.0
      %789 = vmatpush1.msra.mxu0 %v748
      %790 = vmatprep.subr.mxu0 0.0
      %791 = vmatpush1.msra.mxu0 %v749
      %792 = vmatprep.subr.mxu0 0.0
      %793 = vmatpush1.msra.mxu0 %v750
      %794 = vmatprep.subr.mxu0 0.0
      %795 = vmatpush1.msra.mxu0 %v751
      %796 = vmatprep.subr.mxu0 0.0
      %797 = vmatpush1.msra.mxu0 %v752
      %798 = vmatprep.subr.mxu0 0.0
      %799 = vmatpush1.msra.mxu0 %v753
      %800 = vmatprep.subr.mxu0 0.0
      %801 = vmatpush1.msra.mxu0 %v754
      %802 = vmatprep.subr.mxu0 0.0
      %803 = vmatpush1.msra.mxu0 %v755
      %804 = vmatprep.subr.mxu0 0.0
      %805 = vmatpush1.msra.mxu0 %v756
      %806 = vmatprep.subr.mxu0 0.0
      %807 = vmatpush1.msra.mxu0 %v757
      %808 = vmatprep.subr.mxu0 0.0
      %809 = vmatpush1.msra.mxu0 %v758
      %810 = vmatprep.subr.mxu0 0.0
      %811 = vmatpush1.msra.mxu0 %v759
      %812 = vmatprep.subr.mxu0 0.0
      %813 = vmatpush1.msra.mxu0 %v762
      %814 = vmatprep.subr.mxu0 0.0
      %815 = vmatpush1.msra.mxu0 0.0
      %816 = vmatprep.subr.mxu0 0.0
      %817 = vmatpush1.msra.mxu0 0.0
      %818 = vmatprep.subr.mxu0 0.0
      %819 = vmatpush1.msra.mxu0 0.0
      %820 = vmatprep.subr.mxu0 0.0
      %821 = vmatpush1.msra.mxu0 0.0
      %822 = vmatprep.subr.mxu0 0.0
      %823 = vmatpush1.msra.mxu0 0.0
      %824 = vmatprep.subr.mxu0 0.0
      %825 = vmatpush1.msra.mxu0 0.0
      %826 = vmatprep.subr.mxu0 0.0
      %827 = vmatpush1.msra.mxu0 0.0
      %828 = vmatprep.mubr.f32.mxu0 %v392
      %829 = vmatmul.mubr.f32.gmra.mrb[0].mxu0 %v363
      %v830 = vpop.f32.mrb[0].mxu0
      %v831 = vadd.f32 0.0, %v830
      %v832 = vpop.f32.mrb[0].mxu0
      %833 = vdwg.mxu0
      %s834 = scalar_lea.vmem %s4, 32
      %v835 = vld [vmem:[%s834] sm:$0xff]
      %v836 = vld [vmem:[%s834 + $0x8] sm:$0xff]
      %v838 = vsel %vm572, %v835, 0
      %v841 = vsel %vm572, %v836, 0
      %843 = vmatprep.subr.mxu0 0.0
      %844 = vmatpush1.msra.mxu0 %v831
      %845 = vmatprep.subr.mxu0 0.0
      %846 = vmatpush1.msra.mxu0 0.0
      %847 = vmatprep.subr.mxu0 0.0
      %848 = vmatpush1.msra.mxu0 0.0
      %849 = vmatprep.subr.mxu0 0.0
      %850 = vmatpush1.msra.mxu0 0.0
      %851 = vmatprep.subr.mxu0 0.0
      %852 = vmatpush1.msra.mxu0 0.0
      %853 = vmatprep.subr.mxu0 0.0
      %854 = vmatpush1.msra.mxu0 0.0
      %855 = vmatprep.subr.mxu0 0.0
      %856 = vmatpush1.msra.mxu0 0.0
      %857 = vmatprep.subr.mxu0 0.0
      %858 = vmatpush1.msra.mxu0 0.0
      %859 = vmatprep.subr.mxu0 0.0
      %860 = vmatpush1.msra.mxu0 0.0
      %861 = vmatprep.subr.mxu0 0.0
      %862 = vmatpush1.msra.mxu0 0.0
      %863 = vmatprep.subr.mxu0 0.0
      %864 = vmatpush1.msra.mxu0 0.0
      %865 = vmatprep.subr.mxu0 0.0
      %866 = vmatpush1.msra.mxu0 0.0
      %867 = vmatprep.subr.mxu0 0.0
      %868 = vmatpush1.msra.mxu0 0.0
      %869 = vmatprep.subr.mxu0 0.0
      %870 = vmatpush1.msra.mxu0 0.0
      %871 = vmatprep.subr.mxu0 0.0
      %872 = vmatpush1.msra.mxu0 0.0
      %873 = vmatprep.subr.mxu0 0.0
      %874 = vmatpush1.msra.mxu0 0.0
      %875 = vmatprep.subr.mxu0 0.0
      %876 = vmatpush1.msra.mxu0 0.0
      %877 = vmatprep.subr.mxu0 0.0
      %878 = vmatpush1.msra.mxu0 0.0
      %879 = vmatprep.subr.mxu0 0.0
      %880 = vmatpush1.msra.mxu0 0.0
      %881 = vmatprep.subr.mxu0 0.0
      %882 = vmatpush1.msra.mxu0 0.0
      %883 = vmatprep.subr.mxu0 0.0
      %884 = vmatpush1.msra.mxu0 0.0
      %885 = vmatprep.subr.mxu0 0.0
      %886 = vmatpush1.msra.mxu0 0.0
      %887 = vmatprep.subr.mxu0 0.0
      %888 = vmatpush1.msra.mxu0 0.0
      %889 = vmatprep.subr.mxu0 0.0
      %890 = vmatpush1.msra.mxu0 0.0
      %891 = vmatprep.subr.mxu0 0.0
      %892 = vmatpush1.msra.mxu0 0.0
      %893 = vmatprep.subr.mxu0 0.0
      %894 = vmatpush1.msra.mxu0 0.0
      %895 = vmatprep.subr.mxu0 0.0
      %896 = vmatpush1.msra.mxu0 0.0
      %897 = vmatprep.subr.mxu0 0.0
      %898 = vmatpush1.msra.mxu0 0.0
      %899 = vmatprep.subr.mxu0 0.0
      %900 = vmatpush1.msra.mxu0 0.0
      %901 = vmatprep.subr.mxu0 0.0
      %902 = vmatpush1.msra.mxu0 0.0
      %903 = vmatprep.subr.mxu0 0.0
      %904 = vmatpush1.msra.mxu0 0.0
      %905 = vmatprep.subr.mxu0 0.0
      %906 = vmatpush1.msra.mxu0 0.0
      %907 = vmatprep.mubr.f32.mxu0 0.0
      %908 = vmatmul.mubr.f32.gmra.mrb[0].mxu0 %v838
      %v909 = vpop.f32.mrb[0].mxu0
      %v910 = vadd.f32 0.0, %v909
      %v911 = vpop.f32.mrb[0].mxu0
      %912 = vmatprep.mubr.f32.mxu0 0.0
      %913 = vmatmul.mubr.f32.gmra.mrb[0].mxu0 %v841
      %v914 = vpop.f32.mrb[0].mxu0
      %v915 = vadd.f32 0.0, %v914
      %v916 = vpop.f32.mrb[0].mxu0
      %917 = vdwg.mxu0
      %v918 = vadd.f32 %v727, %v910
      %v919 = vadd.f32 %v732, %v915
      %s920 = scalar_lea.vmem %s3, 600
      %v921 = vld [vmem:[%s920] sm:$0xff]
      %v922 = vld [vmem:[%s920 + $0x8] sm:$0xff]
      %v923 = vld [vmem:[%s920 + $0x10] sm:$0xff]
      %v924 = vld [vmem:[%s920 + $0x18] sm:$0xff]
      %v925 = vld [vmem:[%s920 + $0x20] sm:$0xff]
      %v926 = vld [vmem:[%s920 + $0x28] sm:$0xff]
      %v927 = vld [vmem:[%s920 + $0x30] sm:$0xff]
      %v928 = vld [vmem:[%s920 + $0x38] sm:$0xff]
      %v929 = vld [vmem:[%s920 + $0x40] sm:$0xff]
      %v930 = vld [vmem:[%s920 + $0x48] sm:$0xff]
      %v931 = vld [vmem:[%s920 + $0x50] sm:$0xff]
      %v932 = vld [vmem:[%s920 + $0x58] sm:$0xff]
      %v933 = vld [vmem:[%s920 + $0x60] sm:$0xff]
      %v934 = vld [vmem:[%s920 + $0x68] sm:$0xff]
      %v935 = vld [vmem:[%s920 + $0x70] sm:$0xff]
      %v936 = vld [vmem:[%s920 + $0x78] sm:$0xff]
      %v937 = vld [vmem:[%s920 + $0x80] sm:$0xff]
      %v938 = vld [vmem:[%s920 + $0x88] sm:$0xff]
      %v939 = vld [vmem:[%s920 + $0x90] sm:$0xff]
      %v940 = vld [vmem:[%s920 + $0x98] sm:$0xff]
      %v941 = vld [vmem:[%s920 + $0xa0] sm:$0xff]
      %v942 = vld [vmem:[%s920 + $0xa8] sm:$0xff]
      %v943 = vld [vmem:[%s920 + $0xb0] sm:$0xff]
      %v944 = vld [vmem:[%s920 + $0xb8] sm:$0xff]
      %v945 = vld [vmem:[%s920 + $0xc0] sm:$0xf]
      %v947 = vsel %vm394, %v945, 0
      %949 = vmatprep.subr.mxu0 0.0
      %950 = vmatpush1.msra.mxu0 %v921
      %951 = vmatprep.subr.mxu0 0.0
      %952 = vmatpush1.msra.mxu0 %v922
      %953 = vmatprep.subr.mxu0 0.0
      %954 = vmatpush1.msra.mxu0 %v923
      %955 = vmatprep.subr.mxu0 0.0
      %956 = vmatpush1.msra.mxu0 %v924
      %957 = vmatprep.subr.mxu0 0.0
      %958 = vmatpush1.msra.mxu0 %v925
      %959 = vmatprep.subr.mxu0 0.0
      %960 = vmatpush1.msra.mxu0 %v926
      %961 = vmatprep.subr.mxu0 0.0
      %962 = vmatpush1.msra.mxu0 %v927
      %963 = vmatprep.subr.mxu0 0.0
      %964 = vmatpush1.msra.mxu0 %v928
      %965 = vmatprep.subr.mxu0 0.0
      %966 = vmatpush1.msra.mxu0 %v929
      %967 = vmatprep.subr.mxu0 0.0
      %968 = vmatpush1.msra.mxu0 %v930
      %969 = vmatprep.subr.mxu0 0.0
      %970 = vmatpush1.msra.mxu0 %v931
      %971 = vmatprep.subr.mxu0 0.0
      %972 = vmatpush1.msra.mxu0 %v932
      %973 = vmatprep.subr.mxu0 0.0
      %974 = vmatpush1.msra.mxu0 %v933
      %975 = vmatprep.subr.mxu0 0.0
      %976 = vmatpush1.msra.mxu0 %v934
      %977 = vmatprep.subr.mxu0 0.0
      %978 = vmatpush1.msra.mxu0 %v935
      %979 = vmatprep.subr.mxu0 0.0
      %980 = vmatpush1.msra.mxu0 %v936
      %981 = vmatprep.subr.mxu0 0.0
      %982 = vmatpush1.msra.mxu0 %v937
      %983 = vmatprep.subr.mxu0 0.0
      %984 = vmatpush1.msra.mxu0 %v938
      %985 = vmatprep.subr.mxu0 0.0
      %986 = vmatpush1.msra.mxu0 %v939
      %987 = vmatprep.subr.mxu0 0.0
      %988 = vmatpush1.msra.mxu0 %v940
      %989 = vmatprep.subr.mxu0 0.0
      %990 = vmatpush1.msra.mxu0 %v941
      %991 = vmatprep.subr.mxu0 0.0
      %992 = vmatpush1.msra.mxu0 %v942
      %993 = vmatprep.subr.mxu0 0.0
      %994 = vmatpush1.msra.mxu0 %v943
      %995 = vmatprep.subr.mxu0 0.0
      %996 = vmatpush1.msra.mxu0 %v944
      %997 = vmatprep.subr.mxu0 0.0
      %998 = vmatpush1.msra.mxu0 %v947
      %999 = vmatprep.subr.mxu0 0.0
      %1000 = vmatpush1.msra.mxu0 0.0
      %1001 = vmatprep.subr.mxu0 0.0
      %1002 = vmatpush1.msra.mxu0 0.0
      %1003 = vmatprep.subr.mxu0 0.0
      %1004 = vmatpush1.msra.mxu0 0.0
      %1005 = vmatprep.subr.mxu0 0.0
      %1006 = vmatpush1.msra.mxu0 0.0
      %1007 = vmatprep.subr.mxu0 0.0
      %1008 = vmatpush1.msra.mxu0 0.0
      %1009 = vmatprep.subr.mxu0 0.0
      %1010 = vmatpush1.msra.mxu0 0.0
      %1011 = vmatprep.subr.mxu0 0.0
      %1012 = vmatpush1.msra.mxu0 0.0
      %1013 = vmatprep.mubr.f32.mxu0 %v392
      %1014 = vmatmul.mubr.f32.gmra.mrb[0].mxu0 %v363
      %v1015 = vpop.f32.mrb[0].mxu0
      %v1016 = vadd.f32 0.0, %v1015
      %v1017 = vpop.f32.mrb[0].mxu0
      %1018 = vdwg.mxu0
      %s1019 = scalar_lea.vmem %s4, 48
      %v1020 = vld [vmem:[%s1019] sm:$0xff]
      %v1021 = vld [vmem:[%s1019 + $0x8] sm:$0xff]
      %v1023 = vsel %vm572, %v1020, 0
      %v1026 = vsel %vm572, %v1021, 0
      %1028 = vmatprep.subr.mxu0 0.0
      %1029 = vmatpush1.msra.mxu0 %v1016
      %1030 = vmatprep.subr.mxu0 0.0
      %1031 = vmatpush1.msra.mxu0 0.0
      %1032 = vmatprep.subr.mxu0 0.0
      %1033 = vmatpush1.msra.mxu0 0.0
      %1034 = vmatprep.subr.mxu0 0.0
      %1035 = vmatpush1.msra.mxu0 0.0
      %1036 = vmatprep.subr.mxu0 0.0
      %1037 = vmatpush1.msra.mxu0 0.0
      %1038 = vmatprep.subr.mxu0 0.0
      %1039 = vmatpush1.msra.mxu0 0.0
      %1040 = vmatprep.subr.mxu0 0.0
      %1041 = vmatpush1.msra.mxu0 0.0
      %1042 = vmatprep.subr.mxu0 0.0
      %1043 = vmatpush1.msra.mxu0 0.0
      %1044 = vmatprep.subr.mxu0 0.0
      %1045 = vmatpush1.msra.mxu0 0.0
      %1046 = vmatprep.subr.mxu0 0.0
      %1047 = vmatpush1.msra.mxu0 0.0
      %1048 = vmatprep.subr.mxu0 0.0
      %1049 = vmatpush1.msra.mxu0 0.0
      %1050 = vmatprep.subr.mxu0 0.0
      %1051 = vmatpush1.msra.mxu0 0.0
      %1052 = vmatprep.subr.mxu0 0.0
      %1053 = vmatpush1.msra.mxu0 0.0
      %1054 = vmatprep.subr.mxu0 0.0
      %1055 = vmatpush1.msra.mxu0 0.0
      %1056 = vmatprep.subr.mxu0 0.0
      %1057 = vmatpush1.msra.mxu0 0.0
      %1058 = vmatprep.subr.mxu0 0.0
      %1059 = vmatpush1.msra.mxu0 0.0
      %1060 = vmatprep.subr.mxu0 0.0
      %1061 = vmatpush1.msra.mxu0 0.0
      %1062 = vmatprep.subr.mxu0 0.0
      %1063 = vmatpush1.msra.mxu0 0.0
      %1064 = vmatprep.subr.mxu0 0.0
      %1065 = vmatpush1.msra.mxu0 0.0
      %1066 = vmatprep.subr.mxu0 0.0
      %1067 = vmatpush1.msra.mxu0 0.0
      %1068 = vmatprep.subr.mxu0 0.0
      %1069 = vmatpush1.msra.mxu0 0.0
      %1070 = vmatprep.subr.mxu0 0.0
      %1071 = vmatpush1.msra.mxu0 0.0
      %1072 = vmatprep.subr.mxu0 0.0
      %1073 = vmatpush1.msra.mxu0 0.0
      %1074 = vmatprep.subr.mxu0 0.0
      %1075 = vmatpush1.msra.mxu0 0.0
      %1076 = vmatprep.subr.mxu0 0.0
      %1077 = vmatpush1.msra.mxu0 0.0
      %1078 = vmatprep.subr.mxu0 0.0
      %1079 = vmatpush1.msra.mxu0 0.0
      %1080 = vmatprep.subr.mxu0 0.0
      %1081 = vmatpush1.msra.mxu0 0.0
      %1082 = vmatprep.subr.mxu0 0.0
      %1083 = vmatpush1.msra.mxu0 0.0
      %1084 = vmatprep.subr.mxu0 0.0
      %1085 = vmatpush1.msra.mxu0 0.0
      %1086 = vmatprep.subr.mxu0 0.0
      %1087 = vmatpush1.msra.mxu0 0.0
      %1088 = vmatprep.subr.mxu0 0.0
      %1089 = vmatpush1.msra.mxu0 0.0
      %1090 = vmatprep.subr.mxu0 0.0
      %1091 = vmatpush1.msra.mxu0 0.0
      %1092 = vmatprep.mubr.f32.mxu0 0.0
      %1093 = vmatmul.mubr.f32.gmra.mrb[0].mxu0 %v1023
      %v1094 = vpop.f32.mrb[0].mxu0
      %v1095 = vadd.f32 0.0, %v1094
      %v1096 = vpop.f32.mrb[0].mxu0
      %1097 = vmatprep.mubr.f32.mxu0 0.0
      %1098 = vmatmul.mubr.f32.gmra.mrb[0].mxu0 %v1026
      %v1099 = vpop.f32.mrb[0].mxu0
      %v1100 = vadd.f32 0.0, %v1099
      %v1101 = vpop.f32.mrb[0].mxu0
      %1102 = vdwg.mxu0
      %v1103 = vadd.f32 %v918, %v1095
      %v1104 = vadd.f32 %v919, %v1100
      %v1105 = vld [vmem:[%s5] sm:$0xff]
      %v1106 = vld [vmem:[%s5 + $0x8] sm:$0xff]
      %1108 = vset.pattern.permute.xlu0 0
      %1109 = vperm.xlu0 %1108, %v1105
      %v1110 = vpop.permute.xlu0 %1109
      %1113 = vset.pattern.permute.xlu0 0
      %1114 = vperm.xlu0 %1113, %v1106
      %v1115 = vpop.permute.xlu0 %1114
      %v1117 = vadd.f32 %v1103, %v1110
      %v1118 = vadd.f32 %v1104, %v1115
      %v1119 = vmax.f32 %v1117, 0.0
      %v1120 = vmax.f32 %v1118, 0.0
      %vm1121 = vcmask 293888
      %1122 = vst.msk [vmem:[%s251] sm:$0xff] %vm1121, %v1119
      %1123 = vst.msk [vmem:[%s251 + $0x8] sm:$0xff] %vm1121, %v1120
      %s1124 = smul.u32 2, %s17
      %p1125 = scmp.lt.s32.totalorder %s1124, 3
      %s1126 = scalar_select %p1125, %s1124, 3
      %s1127 = smul.addr %s1126, 8
      %s1128 = scalar_lea.vmem %s6, %s1127
      // Predicated region
      $region45: #{cnn_forward.2} parent=43 // pred_check
        %p1129 = pneg %p166
      $region46: #{cnn_forward.2} parent=43 // pred_check_branch
        %1131 = sbr.rel (%p1129) target = $region48
      $region47: #{cnn_forward.2} parent=43 // pred_region
        %s1132 = smul.u32 2, %s17
      $region48: #{cnn_forward.2} parent=43 // pred_fallthru
        _
    $region44: #{cnn_forward.2} parent=5 // pred_fallthru
      _
    %p1133 = scmp.le.s32.totalorder 2, %s12
    // Predicated region
    $region49: #{cnn_forward.2} parent=5 // pred_check
      %p1134 = pneg %p1133
    $region50: #{cnn_forward.2} parent=5 // pred_check_branch
      %1136 = sbr.rel (%p1134) target = $region52
    $region51: #{cnn_forward.2} parent=5 // pred_region
      %s1137 = ssub.s32 %s12, 2
      // Predicated region
      $region53: #{cnn_forward.2} parent=51 // pred_check
        %p1138 = pneg %p172
      $region54: #{cnn_forward.2} parent=51 // pred_check_branch
        %1140 = sbr.rel (%p1138) target = $region56
      $region55: #{cnn_forward.2} parent=51 // pred_region
        %s1141 = smul.u32 2, %s18
        %p1142 = scmp.lt.s32.totalorder %s1141, 3
        %s1143 = scalar_select %p1142, %s1141, 3
        %s1144 = smul.addr %s1143, 8
        %s1145 = scalar_lea.vmem %s6, %s1144
      $region56: #{cnn_forward.2} parent=51 // pred_fallthru
        _
    $region52: #{cnn_forward.2} parent=5 // pred_fallthru
      _
  $region6: #{cnn_forward.2} parent=0 // loop_footer
    %s16 = sadd.s32 1, %s12
  $region7: #{cnn_forward.2} parent=0 // loop_footer_branch
    %11 = sbr.rel target = $region3
  $region8: #{cnn_forward.2} parent=0 // loop_exit
    _

</llo_original>
